<compile_context>
chip_gen: v7x
topology: tpu7x:2x2x1
jax: 0.10.0
libtpu: 0.0.40
codegen_flags: <defaults>
</compile_context>

<pallas_src>
import jax
import jax.numpy as jnp
from jax.experimental import pallas as pl
from jax.experimental.pallas import tpu as pltpu

BN_EPS = 1e-5


def _round_up(v, m):
    return (v + m - 1) // m * m


def _pick_tile_ho(ho, wo, block_rows):
    """Largest divisor of ho whose tile covers at most block_rows output rows."""
    tile = 1
    for d in range(1, ho + 1):
        if ho % d == 0 and d * wo <= block_rows:
            tile = d
    return tile


def conv_bn_relu(x, w, b, gamma, beta, *, padding, stride,
                 block_rows=512, compute_dtype=jnp.float32):
    """x: [N, Cin, H, W] (NCHW), w: [Cout, Cin, KH, KW] (OIHW). Returns NCHW float32."""
    del b  # Conv bias is exactly cancelled by BatchNorm's batch-mean subtraction.

    N, Cin, H, W = x.shape
    Cout, _, KH, KW = w.shape
    Ho = (H + 2 * padding - KH) // stride + 1
    Wo = (W + 2 * padding - KW) // stride + 1

    CIN_PAD = _round_up(Cin, 8)       # sublane-friendly contraction dim
    COUT_PAD = _round_up(Cout, 128)   # lane-dense output channels (unmasked vst)
    TILE_HO = _pick_tile_ho(Ho, Wo, block_rows)
    NUM_HT = Ho // TILE_HO
    TILE_ROWS = TILE_HO * Wo
    Hp, Wp = H + 2 * padding, W + 2 * padding
    NTAPS = KH * KW

    # ---- JAX-side layout prep (input is read once per pass; no im2col in HBM) ----
    x_nhwc = jnp.transpose(x, (0, 2, 3, 1)).astype(compute_dtype)
    xp = jnp.pad(x_nhwc, ((0, 0), (padding, padding), (padding, padding),
                          (0, CIN_PAD - Cin)))
    # OIHW -> (KH*KW, CIN_PAD, COUT_PAD), one [Cin, Cout] slab per kernel tap.
    w_hwio = jnp.transpose(w, (2, 3, 1, 0)).astype(compute_dtype)
    w_hwio = jnp.pad(w_hwio, ((0, 0), (0, 0),
                              (0, CIN_PAD - Cin), (0, COUT_PAD - Cout)))
    w_taps = w_hwio.reshape(NTAPS, CIN_PAD, COUT_PAD)

    gamma_p = jnp.pad(gamma.astype(jnp.float32), (0, COUT_PAD - Cout))
    beta_p = jnp.pad(beta.astype(jnp.float32), (0, COUT_PAD - Cout))

    def conv_tile(x_ref, w_ref):
        """Conv output for this grid step's row tile: [TILE_ROWS, COUT_PAD] f32."""
        t = pl.program_id(1)
        h0 = t * (TILE_HO * stride)
        acc = jnp.zeros((TILE_ROWS, COUT_PAD), jnp.float32)
        for kh in range(KH):
            for kw in range(KW):
                if stride == 1:
                    xs = x_ref[0, pl.ds(h0 + kh, TILE_HO), pl.ds(kw, Wo), :]
                else:
                    xs = x_ref[0, pl.ds(h0 + kh, TILE_HO, stride),
                               pl.ds(kw, Wo, stride), :]
                xs = xs.reshape(TILE_ROWS, CIN_PAD)
                acc = acc + jnp.dot(xs, w_ref[kh * KW + kw],
                                    preferred_element_type=jnp.float32)
        return acc

    # ---- Pass 1: conv + per-tile channel sum / sum-of-squares partials ----
    def stats_kernel(x_ref, w_ref, s_ref):
        acc = conv_tile(x_ref, w_ref)
        ch_sum = jnp.sum(acc, axis=0)
        ch_sq = jnp.sum(acc * acc, axis=0)
        pack = jnp.concatenate([ch_sum[None, :], ch_sq[None, :]], axis=0)
        s_ref[...] = pack.reshape(1, 1, 2, COUT_PAD)

    grid = (N, NUM_HT)
    x_spec = pl.BlockSpec((1, Hp, Wp, CIN_PAD), lambda n, t: (n, 0, 0, 0))
    w_spec = pl.BlockSpec((NTAPS, CIN_PAD, COUT_PAD), lambda n, t: (0, 0, 0))
    cparams = pltpu.CompilerParams(dimension_semantics=("parallel", "parallel"))

    conv_flops = 2 * N * Ho * Wo * NTAPS * CIN_PAD * COUT_PAD
    in_bytes = int(xp.size) * xp.dtype.itemsize + int(w_taps.size) * w_taps.dtype.itemsize

    stats = pl.pallas_call(
        stats_kernel,
        out_shape=jax.ShapeDtypeStruct((N, NUM_HT, 2, COUT_PAD), jnp.float32),
        grid=grid,
        in_specs=[x_spec, w_spec],
        out_specs=pl.BlockSpec((1, 1, 2, COUT_PAD), lambda n, t: (n, t, 0, 0)),
        compiler_params=cparams,
        cost_estimate=pl.CostEstimate(
            flops=conv_flops, transcendentals=0,
            bytes_accessed=in_bytes + N * NUM_HT * 2 * COUT_PAD * 4),
    )(xp, w_taps)

    # ---- Tiny JAX reduction: fused BN scale/shift (training-mode batch statistics) ----
    m_count = N * Ho * Wo
    ch_sum = jnp.sum(stats[:, :, 0, :], axis=(0, 1))
    ch_sq = jnp.sum(stats[:, :, 1, :], axis=(0, 1))
    mean = ch_sum / m_count
    var = jnp.maximum(ch_sq / m_count - mean * mean, 0.0)  # biased var, like PyTorch BN
    scale = gamma_p * jax.lax.rsqrt(var + BN_EPS)
    shift = beta_p - mean * scale
    scale_shift = jnp.concatenate([scale[None, :], shift[None, :]], axis=0)  # (2, COUT_PAD)

    # ---- Pass 2: recompute conv tile, apply fused scale/shift + ReLU (lane-dense store) ----
    def apply_kernel(x_ref, w_ref, ss_ref, o_ref):
        acc = conv_tile(x_ref, w_ref)
        y = jnp.maximum(acc * ss_ref[0:1, :] + ss_ref[1:2, :], 0.0)
        o_ref[...] = y.reshape(1, TILE_HO, Wo, COUT_PAD).astype(o_ref.dtype)

    out_pad = pl.pallas_call(
        apply_kernel,
        out_shape=jax.ShapeDtypeStruct((N, Ho, Wo, COUT_PAD), jnp.float32),
        grid=grid,
        in_specs=[x_spec, w_spec,
                  pl.BlockSpec((2, COUT_PAD), lambda n, t: (0, 0))],
        out_specs=pl.BlockSpec((1, TILE_HO, Wo, COUT_PAD), lambda n, t: (n, t, 0, 0)),
        compiler_params=cparams,
        cost_estimate=pl.CostEstimate(
            flops=conv_flops, transcendentals=0,
            bytes_accessed=in_bytes + N * Ho * Wo * COUT_PAD * 4),
    )(xp, w_taps, scale_shift)

    out = out_pad[:, :, :, :Cout]           # drop padded channels
    return jnp.transpose(out, (0, 3, 1, 2))  # back to NCHW


def conv_bn_relu_reference(x, w, b, gamma, beta, *, padding, stride):
    y = jax.lax.conv_general_dilated(
        x.astype(jnp.float32), w.astype(jnp.float32),
        window_strides=(stride, stride),
        padding=((padding, padding), (padding, padding)),
        dimension_numbers=("NCHW", "OIHW", "NCHW"),
    ) + b[None, :, None, None]
    mean = jnp.mean(y, axis=(0, 2, 3), keepdims=True)
    var = jnp.mean((y - mean) ** 2, axis=(0, 2, 3), keepdims=True)
    y_hat = (y - mean) * jax.lax.rsqrt(var + BN_EPS)
    return jnp.maximum(y_hat * gamma[None, :, None, None] + beta[None, :, None, None], 0.0)


if __name__ == "__main__":
    # ConvBnRelu(in_channels=4, out_channels=8, kernel_size=3, padding=1, stride=1)
    N, Cin, H, W = 2, 4, 16, 16
    Cout, KH, KW = 8, 3, 3
    padding, stride = 1, 1

    key = jax.random.PRNGKey(0)
    kx, kw_, kb, kg, kbt = jax.random.split(key, 5)

    x = jax.random.normal(kx, (N, Cin, H, W), dtype=jnp.float32)
    w = jax.random.normal(kw_, (Cout, Cin, KH, KW), dtype=jnp.float32) * 0.1
    b = jax.random.normal(kb, (Cout,), dtype=jnp.float32) * 0.1
    gamma = 1.0 + 0.1 * jax.random.normal(kg, (Cout,), dtype=jnp.float32)
    beta = 0.1 * jax.random.normal(kbt, (Cout,), dtype=jnp.float32)

    # block_rows=128 -> TILE_HO=8, a (2, 2) grid on this small shape, exercising the
    # tiled/pipelined path. Default 512 targets larger real layers.
    out = conv_bn_relu(x, w, b, gamma, beta, padding=padding, stride=stride,
                       block_rows=128)
    out = jax.block_until_ready(out)

    ref = conv_bn_relu_reference(x, w, b, gamma, beta, padding=padding, stride=stride)
    ref = jax.block_until_ready(ref)

    assert out.shape == (N, Cout, H, W), out.shape
    max_err = float(jnp.max(jnp.abs(out - ref)))
    assert jnp.allclose(out, ref, atol=2e-4, rtol=2e-4), max_err

    print("KERNEL_OK")
</pallas_src>

<mosaic_0001>
module attributes {stable_mosaic.version = 11 : i64} {
  func.func @stats_kernel(%arg0: i32, %arg1: i32, %arg2: memref<1x18x18x8xf32, #tpu.memory_space<vmem>>, %arg3: memref<9x8x128xf32, #tpu.memory_space<vmem>>, %arg4: memref<1x1x2x128xf32, #tpu.memory_space<vmem>>) attributes {dimension_semantics = [#tpu.dimension_semantics<parallel>, #tpu.dimension_semantics<parallel>], iteration_bounds = array<i64: 2, 2>, scalar_prefetch = 0 : i64, scratch_operands = 0 : i64, tpu.core_type = #tpu.core_type<tc>, window_params = [{transform_indices = @transform_0, window_bounds = array<i64: 1, 18, 18, 8>}, {pipeline_mode = #tpu.pipeline_mode<synchronous>, transform_indices = @transform_1, window_bounds = array<i64: 9, 8, 128>}, {transform_indices = @transform_2, window_bounds = array<i64: 1, 1, 2, 128>}]} {
    %c8_i32 = arith.constant 8 : i32
    %0 = arith.muli %arg1, %c8_i32 : i32
    %cst = arith.constant 0.000000e+00 : f32
    %1 = vector.broadcast %cst : f32 to vector<128x128xf32>
    %c0_i32 = arith.constant 0 : i32
    %2 = arith.addi %0, %c0_i32 : i32
    %c0 = arith.constant 0 : index
    %3 = arith.index_cast %2 : i32 to index
    %c0_0 = arith.constant 0 : index
    %c0_1 = arith.constant 0 : index
    %4 = vector.load %arg2[%c0, %3, %c0_0, %c0_1] : memref<1x18x18x8xf32, #tpu.memory_space<vmem>>, vector<1x8x16x8xf32>
    %5 = vector.shape_cast %4 : vector<1x8x16x8xf32> to vector<8x16x8xf32>
    %6 = vector.shape_cast %5 : vector<8x16x8xf32> to vector<128x8xf32>
    %c0_2 = arith.constant 0 : index
    %c0_3 = arith.constant 0 : index
    %c0_4 = arith.constant 0 : index
    %7 = vector.load %arg3[%c0_2, %c0_3, %c0_4] : memref<9x8x128xf32, #tpu.memory_space<vmem>>, vector<1x8x128xf32>
    %8 = vector.shape_cast %7 : vector<1x8x128xf32> to vector<8x128xf32>
    %cst_5 = arith.constant dense<0.000000e+00> : vector<128x128xf32>
    %9 = tpu.matmul %6, %8, %cst_5 {dimension_numbers = #tpu.dot_dimension_numbers<[1], [0], [0], [1], [0, 0, 1, 1], [], []>} : vector<128x8xf32>, vector<8x128xf32>, vector<128x128xf32> -> vector<128x128xf32>
    %10 = arith.addf %1, %9 : vector<128x128xf32>
    %c0_i32_6 = arith.constant 0 : i32
    %11 = arith.addi %0, %c0_i32_6 : i32
    %c0_7 = arith.constant 0 : index
    %12 = arith.index_cast %11 : i32 to index
    %c1 = arith.constant 1 : index
    %c0_8 = arith.constant 0 : index
    %13 = vector.load %arg2[%c0_7, %12, %c1, %c0_8] : memref<1x18x18x8xf32, #tpu.memory_space<vmem>>, vector<1x8x16x8xf32>
    %14 = vector.shape_cast %13 : vector<1x8x16x8xf32> to vector<8x16x8xf32>
    %15 = vector.shape_cast %14 : vector<8x16x8xf32> to vector<128x8xf32>
    %c1_9 = arith.constant 1 : index
    %c0_10 = arith.constant 0 : index
    %c0_11 = arith.constant 0 : index
    %16 = vector.load %arg3[%c1_9, %c0_10, %c0_11] : memref<9x8x128xf32, #tpu.memory_space<vmem>>, vector<1x8x128xf32>
    %17 = vector.shape_cast %16 : vector<1x8x128xf32> to vector<8x128xf32>
    %cst_12 = arith.constant dense<0.000000e+00> : vector<128x128xf32>
    %18 = tpu.matmul %15, %17, %cst_12 {dimension_numbers = #tpu.dot_dimension_numbers<[1], [0], [0], [1], [0, 0, 1, 1], [], []>} : vector<128x8xf32>, vector<8x128xf32>, vector<128x128xf32> -> vector<128x128xf32>
    %19 = arith.addf %10, %18 : vector<128x128xf32>
    %c0_i32_13 = arith.constant 0 : i32
    %20 = arith.addi %0, %c0_i32_13 : i32
    %c0_14 = arith.constant 0 : index
    %21 = arith.index_cast %20 : i32 to index
    %c2 = arith.constant 2 : index
    %c0_15 = arith.constant 0 : index
    %22 = vector.load %arg2[%c0_14, %21, %c2, %c0_15] : memref<1x18x18x8xf32, #tpu.memory_space<vmem>>, vector<1x8x16x8xf32>
    %23 = vector.shape_cast %22 : vector<1x8x16x8xf32> to vector<8x16x8xf32>
    %24 = vector.shape_cast %23 : vector<8x16x8xf32> to vector<128x8xf32>
    %c2_16 = arith.constant 2 : index
    %c0_17 = arith.constant 0 : index
    %c0_18 = arith.constant 0 : index
    %25 = vector.load %arg3[%c2_16, %c0_17, %c0_18] : memref<9x8x128xf32, #tpu.memory_space<vmem>>, vector<1x8x128xf32>
    %26 = vector.shape_cast %25 : vector<1x8x128xf32> to vector<8x128xf32>
    %cst_19 = arith.constant dense<0.000000e+00> : vector<128x128xf32>
    %27 = tpu.matmul %24, %26, %cst_19 {dimension_numbers = #tpu.dot_dimension_numbers<[1], [0], [0], [1], [0, 0, 1, 1], [], []>} : vector<128x8xf32>, vector<8x128xf32>, vector<128x128xf32> -> vector<128x128xf32>
    %28 = arith.addf %19, %27 : vector<128x128xf32>
    %c1_i32 = arith.constant 1 : i32
    %29 = arith.addi %0, %c1_i32 : i32
    %c0_20 = arith.constant 0 : index
    %30 = arith.index_cast %29 : i32 to index
    %c0_21 = arith.constant 0 : index
    %c0_22 = arith.constant 0 : index
    %31 = vector.load %arg2[%c0_20, %30, %c0_21, %c0_22] : memref<1x18x18x8xf32, #tpu.memory_space<vmem>>, vector<1x8x16x8xf32>
    %32 = vector.shape_cast %31 : vector<1x8x16x8xf32> to vector<8x16x8xf32>
    %33 = vector.shape_cast %32 : vector<8x16x8xf32> to vector<128x8xf32>
    %c3 = arith.constant 3 : index
    %c0_23 = arith.constant 0 : index
    %c0_24 = arith.constant 0 : index
    %34 = vector.load %arg3[%c3, %c0_23, %c0_24] : memref<9x8x128xf32, #tpu.memory_space<vmem>>, vector<1x8x128xf32>
    %35 = vector.shape_cast %34 : vector<1x8x128xf32> to vector<8x128xf32>
    %cst_25 = arith.constant dense<0.000000e+00> : vector<128x128xf32>
    %36 = tpu.matmul %33, %35, %cst_25 {dimension_numbers = #tpu.dot_dimension_numbers<[1], [0], [0], [1], [0, 0, 1, 1], [], []>} : vector<128x8xf32>, vector<8x128xf32>, vector<128x128xf32> -> vector<128x128xf32>
    %37 = arith.addf %28, %36 : vector<128x128xf32>
    %c1_i32_26 = arith.constant 1 : i32
    %38 = arith.addi %0, %c1_i32_26 : i32
    %c0_27 = arith.constant 0 : index
    %39 = arith.index_cast %38 : i32 to index
    %c1_28 = arith.constant 1 : index
    %c0_29 = arith.constant 0 : index
    %40 = vector.load %arg2[%c0_27, %39, %c1_28, %c0_29] : memref<1x18x18x8xf32, #tpu.memory_space<vmem>>, vector<1x8x16x8xf32>
    %41 = vector.shape_cast %40 : vector<1x8x16x8xf32> to vector<8x16x8xf32>
    %42 = vector.shape_cast %41 : vector<8x16x8xf32> to vector<128x8xf32>
    %c4 = arith.constant 4 : index
    %c0_30 = arith.constant 0 : index
    %c0_31 = arith.constant 0 : index
    %43 = vector.load %arg3[%c4, %c0_30, %c0_31] : memref<9x8x128xf32, #tpu.memory_space<vmem>>, vector<1x8x128xf32>
    %44 = vector.shape_cast %43 : vector<1x8x128xf32> to vector<8x128xf32>
    %cst_32 = arith.constant dense<0.000000e+00> : vector<128x128xf32>
    %45 = tpu.matmul %42, %44, %cst_32 {dimension_numbers = #tpu.dot_dimension_numbers<[1], [0], [0], [1], [0, 0, 1, 1], [], []>} : vector<128x8xf32>, vector<8x128xf32>, vector<128x128xf32> -> vector<128x128xf32>
    %46 = arith.addf %37, %45 : vector<128x128xf32>
    %c1_i32_33 = arith.constant 1 : i32
    %47 = arith.addi %0, %c1_i32_33 : i32
    %c0_34 = arith.constant 0 : index
    %48 = arith.index_cast %47 : i32 to index
    %c2_35 = arith.constant 2 : index
    %c0_36 = arith.constant 0 : index
    %49 = vector.load %arg2[%c0_34, %48, %c2_35, %c0_36] : memref<1x18x18x8xf32, #tpu.memory_space<vmem>>, vector<1x8x16x8xf32>
    %50 = vector.shape_cast %49 : vector<1x8x16x8xf32> to vector<8x16x8xf32>
    %51 = vector.shape_cast %50 : vector<8x16x8xf32> to vector<128x8xf32>
    %c5 = arith.constant 5 : index
    %c0_37 = arith.constant 0 : index
    %c0_38 = arith.constant 0 : index
    %52 = vector.load %arg3[%c5, %c0_37, %c0_38] : memref<9x8x128xf32, #tpu.memory_space<vmem>>, vector<1x8x128xf32>
    %53 = vector.shape_cast %52 : vector<1x8x128xf32> to vector<8x128xf32>
    %cst_39 = arith.constant dense<0.000000e+00> : vector<128x128xf32>
    %54 = tpu.matmul %51, %53, %cst_39 {dimension_numbers = #tpu.dot_dimension_numbers<[1], [0], [0], [1], [0, 0, 1, 1], [], []>} : vector<128x8xf32>, vector<8x128xf32>, vector<128x128xf32> -> vector<128x128xf32>
    %55 = arith.addf %46, %54 : vector<128x128xf32>
    %c2_i32 = arith.constant 2 : i32
    %56 = arith.addi %0, %c2_i32 : i32
    %c0_40 = arith.constant 0 : index
    %57 = arith.index_cast %56 : i32 to index
    %c0_41 = arith.constant 0 : index
    %c0_42 = arith.constant 0 : index
    %58 = vector.load %arg2[%c0_40, %57, %c0_41, %c0_42] : memref<1x18x18x8xf32, #tpu.memory_space<vmem>>, vector<1x8x16x8xf32>
    %59 = vector.shape_cast %58 : vector<1x8x16x8xf32> to vector<8x16x8xf32>
    %60 = vector.shape_cast %59 : vector<8x16x8xf32> to vector<128x8xf32>
    %c6 = arith.constant 6 : index
    %c0_43 = arith.constant 0 : index
    %c0_44 = arith.constant 0 : index
    %61 = vector.load %arg3[%c6, %c0_43, %c0_44] : memref<9x8x128xf32, #tpu.memory_space<vmem>>, vector<1x8x128xf32>
    %62 = vector.shape_cast %61 : vector<1x8x128xf32> to vector<8x128xf32>
    %cst_45 = arith.constant dense<0.000000e+00> : vector<128x128xf32>
    %63 = tpu.matmul %60, %62, %cst_45 {dimension_numbers = #tpu.dot_dimension_numbers<[1], [0], [0], [1], [0, 0, 1, 1], [], []>} : vector<128x8xf32>, vector<8x128xf32>, vector<128x128xf32> -> vector<128x128xf32>
    %64 = arith.addf %55, %63 : vector<128x128xf32>
    %c2_i32_46 = arith.constant 2 : i32
    %65 = arith.addi %0, %c2_i32_46 : i32
    %c0_47 = arith.constant 0 : index
    %66 = arith.index_cast %65 : i32 to index
    %c1_48 = arith.constant 1 : index
    %c0_49 = arith.constant 0 : index
    %67 = vector.load %arg2[%c0_47, %66, %c1_48, %c0_49] : memref<1x18x18x8xf32, #tpu.memory_space<vmem>>, vector<1x8x16x8xf32>
    %68 = vector.shape_cast %67 : vector<1x8x16x8xf32> to vector<8x16x8xf32>
    %69 = vector.shape_cast %68 : vector<8x16x8xf32> to vector<128x8xf32>
    %c7 = arith.constant 7 : index
    %c0_50 = arith.constant 0 : index
    %c0_51 = arith.constant 0 : index
    %70 = vector.load %arg3[%c7, %c0_50, %c0_51] : memref<9x8x128xf32, #tpu.memory_space<vmem>>, vector<1x8x128xf32>
    %71 = vector.shape_cast %70 : vector<1x8x128xf32> to vector<8x128xf32>
    %cst_52 = arith.constant dense<0.000000e+00> : vector<128x128xf32>
    %72 = tpu.matmul %69, %71, %cst_52 {dimension_numbers = #tpu.dot_dimension_numbers<[1], [0], [0], [1], [0, 0, 1, 1], [], []>} : vector<128x8xf32>, vector<8x128xf32>, vector<128x128xf32> -> vector<128x128xf32>
    %73 = arith.addf %64, %72 : vector<128x128xf32>
    %c2_i32_53 = arith.constant 2 : i32
    %74 = arith.addi %0, %c2_i32_53 : i32
    %c0_54 = arith.constant 0 : index
    %75 = arith.index_cast %74 : i32 to index
    %c2_55 = arith.constant 2 : index
    %c0_56 = arith.constant 0 : index
    %76 = vector.load %arg2[%c0_54, %75, %c2_55, %c0_56] : memref<1x18x18x8xf32, #tpu.memory_space<vmem>>, vector<1x8x16x8xf32>
    %77 = vector.shape_cast %76 : vector<1x8x16x8xf32> to vector<8x16x8xf32>
    %78 = vector.shape_cast %77 : vector<8x16x8xf32> to vector<128x8xf32>
    %c8 = arith.constant 8 : index
    %c0_57 = arith.constant 0 : index
    %c0_58 = arith.constant 0 : index
    %79 = vector.load %arg3[%c8, %c0_57, %c0_58] : memref<9x8x128xf32, #tpu.memory_space<vmem>>, vector<1x8x128xf32>
    %80 = vector.shape_cast %79 : vector<1x8x128xf32> to vector<8x128xf32>
    %cst_59 = arith.constant dense<0.000000e+00> : vector<128x128xf32>
    %81 = tpu.matmul %78, %80, %cst_59 {dimension_numbers = #tpu.dot_dimension_numbers<[1], [0], [0], [1], [0, 0, 1, 1], [], []>} : vector<128x8xf32>, vector<8x128xf32>, vector<128x128xf32> -> vector<128x128xf32>
    %82 = arith.addf %73, %81 : vector<128x128xf32>
    %cst_60 = arith.constant dense<0.000000e+00> : vector<128xf32>
    %83 = vector.multi_reduction <add>, %82, %cst_60 [0] : vector<128x128xf32> to vector<128xf32>
    %84 = arith.mulf %82, %82 : vector<128x128xf32>
    %cst_61 = arith.constant dense<0.000000e+00> : vector<128xf32>
    %85 = vector.multi_reduction <add>, %84, %cst_61 [0] : vector<128x128xf32> to vector<128xf32>
    %86 = vector.shape_cast %83 : vector<128xf32> to vector<1x128xf32>
    %87 = vector.shape_cast %85 : vector<128xf32> to vector<1x128xf32>
    %88 = tpu.concatenate %86, %87 in 0 : vector<1x128xf32>, vector<1x128xf32> -> vector<2x128xf32>
    %89 = vector.shape_cast %88 : vector<2x128xf32> to vector<1x1x2x128xf32>
    %c0_62 = arith.constant 0 : index
    %c0_63 = arith.constant 0 : index
    %c0_64 = arith.constant 0 : index
    %c0_65 = arith.constant 0 : index
    %90 = vector.load %arg4[%c0_62, %c0_63, %c0_64, %c0_65] : memref<1x1x2x128xf32, #tpu.memory_space<vmem>>, vector<1x1x2x128xf32>
    tpu.vector_store %arg4[%c0_62, %c0_63, %c0_64, %c0_65], %89 {strides = array<i32>} : memref<1x1x2x128xf32, #tpu.memory_space<vmem>>, vector<1x1x2x128xf32>,
    return
  }
  func.func @transform_0(%arg0: i32, %arg1: i32) -> (i32, i32, i32, i32) {
    %c0_i32 = arith.constant 0 : i32
    %c0_i32_0 = arith.constant 0 : i32
    %c0_i32_1 = arith.constant 0 : i32
    %c0_i32_2 = arith.constant 0 : i32
    return %arg0, %c0_i32, %c0_i32_0, %c0_i32_1 : i32, i32, i32, i32
  }
  func.func @transform_1(%arg0: i32, %arg1: i32) -> (i32, i32, i32) {
    %c0_i32 = arith.constant 0 : i32
    %c0_i32_0 = arith.constant 0 : i32
    %c0_i32_1 = arith.constant 0 : i32
    %c0_i32_2 = arith.constant 0 : i32
    return %c0_i32, %c0_i32_0, %c0_i32_1 : i32, i32, i32
  }
  func.func @transform_2(%arg0: i32, %arg1: i32) -> (i32, i32, i32, i32) {
    %c0_i32 = arith.constant 0 : i32
    %c0_i32_0 = arith.constant 0 : i32
    %c0_i32_1 = arith.constant 0 : i32
    return %arg0, %arg1, %c0_i32, %c0_i32_0 : i32, i32, i32, i32
  }
}

</mosaic_0001>

<llo_original>
// kernel: tpu_custom_call.1
$region0: #{tpu_custom_call.1}
  #allocation0 [shape = 'u32[]', space=smem, size = 0x4, offset = 0x4, fixed_abs, tag = 'smem constant byte address 0x4 - core index']
  #allocation1 [shape = 'u32[144,128]{1,0:T(1,128)}', space=vmem, size = 0x12000, scoped, tag = 'internal scratch']
  %s0 = inlined_call_operand.vmem [shape: f32[2,18,18,8], index: 0, kind: input, shape index: {}]
  %s1 = inlined_call_operand.vmem [shape: f32[9,8,128], index: 1, kind: input, shape index: {}]
  %s2 = inlined_call_operand.hbm [shape: f32[2,2,2,128], index: 2, kind: output, shape index: {}]
  %s3 = sld [smem:[#allocation0]]
  $region41: #{tpu_custom_call.1} parent=0
    _
  %s5 = ssub.s32 1, %s3
  %s6 = scalar_select 0, %s5, %s3
  $region1: #{tpu_custom_call.1} parent=0
    #allocation2 [shape = 'u8[2048]{0}', space=vmem, size = 0x800, scoped, tag = 'output window, operand 0']
    #allocation3 [shape = 's32[2]{0}', space=sflag, size = 0x8, scoped, tag = 'scoped memory for tpu_custom_call.1']
    %7 = vsyncpa [#allocation3], 0
    %s8 = scalar_lea.sflag [#allocation3], 1
    %9 = vsyncpa %s8, 0
    loop: start=0, step=1, limit=6
    $region2: #{tpu_custom_call.1} parent=1 // loop_pre_header
      _
    $region3: #{tpu_custom_call.1} parent=1 // loop_header
      %s11 = sphi 0, %s15
      %p12 = scmp.ge.s32.totalorder %s11, 6
      %s18 = sphi 0, %s30
      %s19 = sphi 0, %s26
      %s20 = sphi 0, %s18
      %s21 = sphi 0, %s19
      %s22 = sphi 0, %s20
      %s23 = sphi 0, %s21
      %s33 = sphi 0, %s35
      %s36 = sphi 0, %s33
      %s37 = sphi 0, %s36
      %s53 = sphi 0, %s37
      %s57 = sphi 0, %s57
      %s59 = sphi 0, %s57
      %s60 = sphi 0, %s59
      %s74 = sphi 0, %s60
      %s82 = sphi 0, %s84
      %s85 = sphi 0, %s82
      %s86 = sphi 0, %s85
      %s102 = sphi 0, %s86
    $region4: #{tpu_custom_call.1} parent=1 // loop_header_branch
      %14 = sbr.rel (%p12) target = $region8
    $region5: #{tpu_custom_call.1} parent=1 // loop_body
      %s16 = ssub.s32 %s11, 1
      %s17 = ssub.s32 %s11, 2
      %s24 = sadd.s32 1, %s19
      %p25 = scmp.ge.s32.totalorder %s24, 2
      %s26 = scalar_select %p25, 0, %s24
      %s27 = sadd.s32 1, %s18
      %s28 = scalar_select %p25, %s27, %s18
      %p29 = scmp.ge.s32.totalorder %s28, 2
      %s30 = scalar_select %p29, 0, %s28
      %s31 = ssub.s32 %s18, %s30
      %p32 = scmp.eq.s32.totalorder %s31, 0
      %s34 = sadd.s32 %s33, 1
      %s35 = scalar_select %p32, %s33, %s34
      %p38 = pneg %p32
      %p39 = scmp.eq.s32.totalorder %s11, 3
      %p40 = por %p38, %p39
      %p41 = scmp.ne.s32.totalorder %s33, %s36
      %p42 = scmp.eq.s32.totalorder %s11, 0
      %p43 = por %p41, %p42
      %p44 = scmp.ne.s32.totalorder %s33, %s36
      %p45 = scmp.eq.s32.totalorder %s16, 3
      %p46 = por %p44, %p45
      %p47 = scmp.ne.s32.totalorder %s36, %s37
      %p48 = scmp.eq.s32.totalorder %s16, 0
      %p49 = por %p47, %p48
      %p50 = scmp.ne.s32.totalorder %s36, %s37
      %p51 = scmp.eq.s32.totalorder %s17, 3
      %p52 = por %p50, %p51
      %p54 = scmp.ne.s32.totalorder %s37, %s53
      %p55 = scmp.eq.s32.totalorder %s17, 0
      %p56 = por %p54, %p55
      %s58 = sadd.s32 %s57, 1
      %p61 = scmp.eq.s32.totalorder %s11, 3
      %p62 = scmp.ne.s32.totalorder %s57, %s59
      %p63 = scmp.eq.s32.totalorder %s11, 0
      %p64 = por %p62, %p63
      %p65 = scmp.ne.s32.totalorder %s57, %s59
      %p66 = scmp.eq.s32.totalorder %s16, 3
      %p67 = por %p65, %p66
      %p68 = scmp.ne.s32.totalorder %s59, %s60
      %p69 = scmp.eq.s32.totalorder %s16, 0
      %p70 = por %p68, %p69
      %p71 = scmp.ne.s32.totalorder %s59, %s60
      %p72 = scmp.eq.s32.totalorder %s17, 3
      %p73 = por %p71, %p72
      %p75 = scmp.ne.s32.totalorder %s60, %s74
      %p76 = scmp.eq.s32.totalorder %s17, 0
      %p77 = por %p75, %p76
      %s78 = ssub.s32 %s18, %s30
      %s79 = ssub.s32 %s19, %s26
      %s80 = sor.u32 %s78, %s79
      %p81 = scmp.eq.s32.totalorder %s80, 0
      %s83 = sadd.s32 %s82, 1
      %s84 = scalar_select %p81, %s82, %s83
      %p87 = pneg %p81
      %p88 = scmp.eq.s32.totalorder %s11, 3
      %p89 = por %p87, %p88
      %p90 = scmp.ne.s32.totalorder %s82, %s85
      %p91 = scmp.eq.s32.totalorder %s11, 0
      %p92 = por %p90, %p91
      %p93 = scmp.ne.s32.totalorder %s82, %s85
      %p94 = scmp.eq.s32.totalorder %s16, 3
      %p95 = por %p93, %p94
      %p96 = scmp.ne.s32.totalorder %s85, %s86
      %p97 = scmp.eq.s32.totalorder %s16, 0
      %p98 = por %p96, %p97
      %p99 = scmp.ne.s32.totalorder %s85, %s86
      %p100 = scmp.eq.s32.totalorder %s17, 3
      %p101 = por %p99, %p100
      %p103 = scmp.ne.s32.totalorder %s86, %s102
      %p104 = scmp.eq.s32.totalorder %s17, 0
      %p105 = por %p103, %p104
      %p106 = scmp.le.s32.totalorder 1, %s11
      %p107 = scmp.lt.s32.totalorder %s11, 5
      %p108 = pnand %p106, %p107
      %p109 = pneg %p108
      // Predicated region
      $region9: #{tpu_custom_call.1} parent=5 // pred_check
        _
      $region10: #{tpu_custom_call.1} parent=5 // pred_check_branch
        %111 = sbr.rel (%p108) target = $region12
      $region11: #{tpu_custom_call.1} parent=5 // pred_region
        %s112 = ssub.s32 %s11, 1
        // Predicated region
        $region13: #{tpu_custom_call.1} parent=11 // pred_check
          %p113 = pneg %p70
        $region14: #{tpu_custom_call.1} parent=11 // pred_check_branch
          %115 = sbr.rel (%p113) target = $region16
        $region15: #{tpu_custom_call.1} parent=11 // pred_region
          _
        $region16: #{tpu_custom_call.1} parent=11 // pred_fallthru
          _
      $region12: #{tpu_custom_call.1} parent=5 // pred_fallthru
        _
      %p116 = scmp.lt.s32.totalorder %s11, 4
      // Predicated region
      $region17: #{tpu_custom_call.1} parent=5 // pred_check
        %p117 = pneg %p116
      $region18: #{tpu_custom_call.1} parent=5 // pred_check_branch
        %119 = sbr.rel (%p117) target = $region20
      $region19: #{tpu_custom_call.1} parent=5 // pred_region
        // Predicated region
        $region21: #{tpu_custom_call.1} parent=19 // pred_check
          %p120 = pneg %p43
        $region22: #{tpu_custom_call.1} parent=19 // pred_check_branch
          %122 = sbr.rel (%p120) target = $region24
        $region23: #{tpu_custom_call.1} parent=19 // pred_region
          %p123 = scmp.lt.s32.totalorder %s18, 1
          %s124 = scalar_select %p123, %s18, 1
          %s125 = smul.addr %s124, 54
          %s126 = smul.addr %s125, 8
          %s127 = scalar_lea.vmem %s0, %s126
        $region24: #{tpu_custom_call.1} parent=19 // pred_fallthru
          _
      $region20: #{tpu_custom_call.1} parent=5 // pred_fallthru
        _
      %p128 = scmp.le.s32.totalorder 1, %s11
      %p129 = scmp.lt.s32.totalorder %s11, 5
      %p130 = pnand %p128, %p129
      %p131 = pneg %p130
      // Predicated region
      $region25: #{tpu_custom_call.1} parent=5 // pred_check
        _
      $region26: #{tpu_custom_call.1} parent=5 // pred_check_branch
        %133 = sbr.rel (%p130) target = $region28
      $region27: #{tpu_custom_call.1} parent=5 // pred_region
        %s134 = ssub.s32 %s11, 1
        %p135 = scmp.lt.s32.totalorder %s20, 1
        %s136 = scalar_select %p135, %s20, 1
        %s137 = smul.addr %s136, 54
        %s138 = smul.addr %s137, 8
        %s139 = scalar_lea.vmem %s0, %s138
        %p140 = pneg %p49
        %p141 = pneg %p46
        %p142 = pneg %p70
        %p143 = pneg %p67
        %p144 = pneg %p98
        %p145 = pneg %p95
        %s146 = sand.u32 %s85, 1
        %s147 = scalar_lea.sflag [#allocation3], %s146
        %s148 = sand.u32 %s85, 1
        %s149 = smul.addr %s148, 2
        %s150 = scalar_lea.vmem [#allocation2], %s149
        %p151 = scmp.lt.s32.totalorder %s20, 1
        %s152 = scalar_select %p151, %s20, 1
        %s153 = smul.addr %s152, 54
        %s154 = smul.addr %s153, 8
        %s155 = scalar_lea.vmem %s0, %s154
        %s156 = smul.u32 %s21, 8
        %s157 = smul.u32 %s156, 24
        %s158 = scalar_lea.vmem %s155, %s157
        %v159 = vld [vmem:[%s158] sm:$0xff]
        %v160 = vld [vmem:[%s158 + $0x8] sm:$0xff]
        %v161 = vld [vmem:[%s158 + $0x18] sm:$0xff]
        %v162 = vld [vmem:[%s158 + $0x20] sm:$0xff]
        %v163 = vld [vmem:[%s158 + $0x30] sm:$0xff]
        %v164 = vld [vmem:[%s158 + $0x38] sm:$0xff]
        %v165 = vld [vmem:[%s158 + $0x48] sm:$0xff]
        %v166 = vld [vmem:[%s158 + $0x50] sm:$0xff]
        %v167 = vld [vmem:[%s158 + $0x60] sm:$0xff]
        %v168 = vld [vmem:[%s158 + $0x68] sm:$0xff]
        %v169 = vld [vmem:[%s158 + $0x78] sm:$0xff]
        %v170 = vld [vmem:[%s158 + $0x80] sm:$0xff]
        %v171 = vld [vmem:[%s158 + $0x90] sm:$0xff]
        %v172 = vld [vmem:[%s158 + $0x98] sm:$0xff]
        %v173 = vld [vmem:[%s158 + $0xa8] sm:$0xff]
        %v174 = vld [vmem:[%s158 + $0xb0] sm:$0xff]
        %v175 = vld [vmem:[%s1] sm:$0xff]
        %v176 = vld [vmem:[%s158 + $0x1] sm:$0xff]
        %v177 = vld [vmem:[%s158 + $0x9] sm:$0xff]
        %v178 = vld [vmem:[%s158 + $0x19] sm:$0xff]
        %v179 = vld [vmem:[%s158 + $0x21] sm:$0xff]
        %v180 = vld [vmem:[%s158 + $0x31] sm:$0xff]
        %v181 = vld [vmem:[%s158 + $0x39] sm:$0xff]
        %v182 = vld [vmem:[%s158 + $0x49] sm:$0xff]
        %v183 = vld [vmem:[%s158 + $0x51] sm:$0xff]
        %v184 = vld [vmem:[%s158 + $0x61] sm:$0xff]
        %v185 = vld [vmem:[%s158 + $0x69] sm:$0xff]
        %v186 = vld [vmem:[%s158 + $0x79] sm:$0xff]
        %v187 = vld [vmem:[%s158 + $0x81] sm:$0xff]
        %v188 = vld [vmem:[%s158 + $0x91] sm:$0xff]
        %v189 = vld [vmem:[%s158 + $0x99] sm:$0xff]
        %v190 = vld [vmem:[%s158 + $0xa9] sm:$0xff]
        %v191 = vld [vmem:[%s158 + $0xb1] sm:$0xff]
        %s192 = scalar_lea.vmem %s1, 8
        %v193 = vld [vmem:[%s192] sm:$0xff]
        %vm194 = vcmask 64512
        %v196 = vsel %vm194, %v176, 0
        %v199 = vsel %vm194, %v177, 0
        %v202 = vsel %vm194, %v178, 0
        %v205 = vsel %vm194, %v179, 0
        %v208 = vsel %vm194, %v180, 0
        %v211 = vsel %vm194, %v181, 0
        %v214 = vsel %vm194, %v182, 0
        %v217 = vsel %vm194, %v183, 0
        %v220 = vsel %vm194, %v184, 0
        %v223 = vsel %vm194, %v185, 0
        %v226 = vsel %vm194, %v186, 0
        %v229 = vsel %vm194, %v187, 0
        %v232 = vsel %vm194, %v188, 0
        %v235 = vsel %vm194, %v189, 0
        %v238 = vsel %vm194, %v190, 0
        %v241 = vsel %vm194, %v191, 0
        %243 = vmatprep.subr.mxu0 0.0
        %244 = vmatpush1.msra.mxu0 %v193
        %245 = vmatprep.subr.mxu0 0.0
        %246 = vmatpush1.msra.mxu0 0.0
        %247 = vmatprep.subr.mxu0 0.0
        %248 = vmatpush1.msra.mxu0 0.0
        %249 = vmatprep.subr.mxu0 0.0
        %250 = vmatpush1.msra.mxu0 0.0
        %251 = vmatprep.subr.mxu0 0.0
        %252 = vmatpush1.msra.mxu0 0.0
        %253 = vmatprep.subr.mxu0 0.0
        %254 = vmatpush1.msra.mxu0 0.0
        %255 = vmatprep.subr.mxu0 0.0
        %256 = vmatpush1.msra.mxu0 0.0
        %257 = vmatprep.subr.mxu0 0.0
        %258 = vmatpush1.msra.mxu0 0.0
        %259 = vmatprep.subr.mxu0 0.0
        %260 = vmatpush1.msra.mxu0 0.0
        %261 = vmatprep.subr.mxu0 0.0
        %262 = vmatpush1.msra.mxu0 0.0
        %263 = vmatprep.subr.mxu0 0.0
        %264 = vmatpush1.msra.mxu0 0.0
        %265 = vmatprep.subr.mxu0 0.0
        %266 = vmatpush1.msra.mxu0 0.0
        %267 = vmatprep.subr.mxu0 0.0
        %268 = vmatpush1.msra.mxu0 0.0
        %269 = vmatprep.subr.mxu0 0.0
        %270 = vmatpush1.msra.mxu0 0.0
        %271 = vmatprep.subr.mxu0 0.0
        %272 = vmatpush1.msra.mxu0 0.0
        %273 = vmatprep.subr.mxu0 0.0
        %274 = vmatpush1.msra.mxu0 0.0
        %275 = vmatprep.subr.mxu0 0.0
        %276 = vmatpush1.msra.mxu0 0.0
        %277 = vmatprep.subr.mxu0 0.0
        %278 = vmatpush1.msra.mxu0 0.0
        %279 = vmatprep.subr.mxu0 0.0
        %280 = vmatpush1.msra.mxu0 0.0
        %281 = vmatprep.subr.mxu0 0.0
        %282 = vmatpush1.msra.mxu0 0.0
        %283 = vmatprep.subr.mxu0 0.0
        %284 = vmatpush1.msra.mxu0 0.0
        %285 = vmatprep.subr.mxu0 0.0
        %286 = vmatpush1.msra.mxu0 0.0
        %287 = vmatprep.subr.mxu0 0.0
        %288 = vmatpush1.msra.mxu0 0.0
        %289 = vmatprep.subr.mxu0 0.0
        %290 = vmatpush1.msra.mxu0 0.0
        %291 = vmatprep.subr.mxu0 0.0
        %292 = vmatpush1.msra.mxu0 0.0
        %293 = vmatprep.subr.mxu0 0.0
        %294 = vmatpush1.msra.mxu0 0.0
        %295 = vmatprep.subr.mxu0 0.0
        %296 = vmatpush1.msra.mxu0 0.0
        %297 = vmatprep.subr.mxu0 0.0
        %298 = vmatpush1.msra.mxu0 0.0
        %299 = vmatprep.subr.mxu0 0.0
        %300 = vmatpush1.msra.mxu0 0.0
        %301 = vmatprep.subr.mxu0 0.0
        %302 = vmatpush1.msra.mxu0 0.0
        %303 = vmatprep.subr.mxu0 0.0
        %304 = vmatpush1.msra.mxu0 0.0
        %305 = vmatprep.subr.mxu0 0.0
        %306 = vmatpush1.msra.mxu0 0.0
        %307 = vmatprep.mubr.f32.mxu0 0.0
        %308 = vmatmul.mubr.f32.gmra.mrb[0].mxu0 %v196
        %v309 = vpop.f32.mrb[0].mxu0
        %v310 = vadd.f32 0.0, %v309
        %v311 = vpop.f32.mrb[0].mxu0
        %312 = vmatprep.mubr.f32.mxu0 0.0
        %313 = vmatmul.mubr.f32.gmra.mrb[0].mxu0 %v199
        %v314 = vpop.f32.mrb[0].mxu0
        %v315 = vadd.f32 0.0, %v314
        %v316 = vpop.f32.mrb[0].mxu0
        %317 = vmatprep.mubr.f32.mxu0 0.0
        %318 = vmatmul.mubr.f32.gmra.mrb[0].mxu0 %v202
        %v319 = vpop.f32.mrb[0].mxu0
        %v320 = vadd.f32 0.0, %v319
        %v321 = vpop.f32.mrb[0].mxu0
        %322 = vmatprep.mubr.f32.mxu0 0.0
        %323 = vmatmul.mubr.f32.gmra.mrb[0].mxu0 %v205
        %v324 = vpop.f32.mrb[0].mxu0
        %v325 = vadd.f32 0.0, %v324
        %v326 = vpop.f32.mrb[0].mxu0
        %327 = vmatprep.mubr.f32.mxu0 0.0
        %328 = vmatmul.mubr.f32.gmra.mrb[0].mxu0 %v208
        %v329 = vpop.f32.mrb[0].mxu0
        %v330 = vadd.f32 0.0, %v329
        %v331 = vpop.f32.mrb[0].mxu0
        %332 = vmatprep.mubr.f32.mxu0 0.0
        %333 = vmatmul.mubr.f32.gmra.mrb[0].mxu0 %v211
        %v334 = vpop.f32.mrb[0].mxu0
        %v335 = vadd.f32 0.0, %v334
        %v336 = vpop.f32.mrb[0].mxu0
        %337 = vmatprep.mubr.f32.mxu0 0.0
        %338 = vmatmul.mubr.f32.gmra.mrb[0].mxu0 %v214
        %v339 = vpop.f32.mrb[0].mxu0
        %v340 = vadd.f32 0.0, %v339
        %v341 = vpop.f32.mrb[0].mxu0
        %342 = vmatprep.mubr.f32.mxu0 0.0
        %343 = vmatmul.mubr.f32.gmra.mrb[0].mxu0 %v217
        %v344 = vpop.f32.mrb[0].mxu0
        %v345 = vadd.f32 0.0, %v344
        %v346 = vpop.f32.mrb[0].mxu0
        %347 = vmatprep.mubr.f32.mxu0 0.0
        %348 = vmatmul.mubr.f32.gmra.mrb[0].mxu0 %v220
        %v349 = vpop.f32.mrb[0].mxu0
        %v350 = vadd.f32 0.0, %v349
        %v351 = vpop.f32.mrb[0].mxu0
        %352 = vmatprep.mubr.f32.mxu0 0.0
        %353 = vmatmul.mubr.f32.gmra.mrb[0].mxu0 %v223
        %v354 = vpop.f32.mrb[0].mxu0
        %v355 = vadd.f32 0.0, %v354
        %v356 = vpop.f32.mrb[0].mxu0
        %357 = vmatprep.mubr.f32.mxu0 0.0
        %358 = vmatmul.mubr.f32.gmra.mrb[0].mxu0 %v226
        %v359 = vpop.f32.mrb[0].mxu0
        %v360 = vadd.f32 0.0, %v359
        %v361 = vpop.f32.mrb[0].mxu0
        %362 = vmatprep.mubr.f32.mxu0 0.0
        %363 = vmatmul.mubr.f32.gmra.mrb[0].mxu0 %v229
        %v364 = vpop.f32.mrb[0].mxu0
        %v365 = vadd.f32 0.0, %v364
        %v366 = vpop.f32.mrb[0].mxu0
        %367 = vmatprep.mubr.f32.mxu0 0.0
        %368 = vmatmul.mubr.f32.gmra.mrb[0].mxu0 %v232
        %v369 = vpop.f32.mrb[0].mxu0
        %v370 = vadd.f32 0.0, %v369
        %v371 = vpop.f32.mrb[0].mxu0
        %372 = vmatprep.mubr.f32.mxu0 0.0
        %373 = vmatmul.mubr.f32.gmra.mrb[0].mxu0 %v235
        %v374 = vpop.f32.mrb[0].mxu0
        %v375 = vadd.f32 0.0, %v374
        %v376 = vpop.f32.mrb[0].mxu0
        %377 = vmatprep.mubr.f32.mxu0 0.0
        %378 = vmatmul.mubr.f32.gmra.mrb[0].mxu0 %v238
        %v379 = vpop.f32.mrb[0].mxu0
        %v380 = vadd.f32 0.0, %v379
        %v381 = vpop.f32.mrb[0].mxu0
        %382 = vmatprep.mubr.f32.mxu0 0.0
        %383 = vmatmul.mubr.f32.gmra.mrb[0].mxu0 %v241
        %v384 = vpop.f32.mrb[0].mxu0
        %v385 = vadd.f32 0.0, %v384
        %v386 = vpop.f32.mrb[0].mxu0
        %387 = vdwg.mxu0
        %v389 = vsel %vm194, %v159, 0
        %v392 = vsel %vm194, %v160, 0
        %v395 = vsel %vm194, %v161, 0
        %v398 = vsel %vm194, %v162, 0
        %v401 = vsel %vm194, %v163, 0
        %v404 = vsel %vm194, %v164, 0
        %v407 = vsel %vm194, %v165, 0
        %v410 = vsel %vm194, %v166, 0
        %v413 = vsel %vm194, %v167, 0
        %v416 = vsel %vm194, %v168, 0
        %v419 = vsel %vm194, %v169, 0
        %v422 = vsel %vm194, %v170, 0
        %v425 = vsel %vm194, %v171, 0
        %v428 = vsel %vm194, %v172, 0
        %v431 = vsel %vm194, %v173, 0
        %v434 = vsel %vm194, %v174, 0
        %436 = vmatprep.subr.mxu0 0.0
        %437 = vmatpush1.msra.mxu0 %v175
        %438 = vmatprep.subr.mxu0 0.0
        %439 = vmatpush1.msra.mxu0 0.0
        %440 = vmatprep.subr.mxu0 0.0
        %441 = vmatpush1.msra.mxu0 0.0
        %442 = vmatprep.subr.mxu0 0.0
        %443 = vmatpush1.msra.mxu0 0.0
        %444 = vmatprep.subr.mxu0 0.0
        %445 = vmatpush1.msra.mxu0 0.0
        %446 = vmatprep.subr.mxu0 0.0
        %447 = vmatpush1.msra.mxu0 0.0
        %448 = vmatprep.subr.mxu0 0.0
        %449 = vmatpush1.msra.mxu0 0.0
        %450 = vmatprep.subr.mxu0 0.0
        %451 = vmatpush1.msra.mxu0 0.0
        %452 = vmatprep.subr.mxu0 0.0
        %453 = vmatpush1.msra.mxu0 0.0
        %454 = vmatprep.subr.mxu0 0.0
        %455 = vmatpush1.msra.mxu0 0.0
        %456 = vmatprep.subr.mxu0 0.0
        %457 = vmatpush1.msra.mxu0 0.0
        %458 = vmatprep.subr.mxu0 0.0
        %459 = vmatpush1.msra.mxu0 0.0
        %460 = vmatprep.subr.mxu0 0.0
        %461 = vmatpush1.msra.mxu0 0.0
        %462 = vmatprep.subr.mxu0 0.0
        %463 = vmatpush1.msra.mxu0 0.0
        %464 = vmatprep.subr.mxu0 0.0
        %465 = vmatpush1.msra.mxu0 0.0
        %466 = vmatprep.subr.mxu0 0.0
        %467 = vmatpush1.msra.mxu0 0.0
        %468 = vmatprep.subr.mxu0 0.0
        %469 = vmatpush1.msra.mxu0 0.0
        %470 = vmatprep.subr.mxu0 0.0
        %471 = vmatpush1.msra.mxu0 0.0
        %472 = vmatprep.subr.mxu0 0.0
        %473 = vmatpush1.msra.mxu0 0.0
        %474 = vmatprep.subr.mxu0 0.0
        %475 = vmatpush1.msra.mxu0 0.0
        %476 = vmatprep.subr.mxu0 0.0
        %477 = vmatpush1.msra.mxu0 0.0
        %478 = vmatprep.subr.mxu0 0.0
        %479 = vmatpush1.msra.mxu0 0.0
        %480 = vmatprep.subr.mxu0 0.0
        %481 = vmatpush1.msra.mxu0 0.0
        %482 = vmatprep.subr.mxu0 0.0
        %483 = vmatpush1.msra.mxu0 0.0
        %484 = vmatprep.subr.mxu0 0.0
        %485 = vmatpush1.msra.mxu0 0.0
        %486 = vmatprep.subr.mxu0 0.0
        %487 = vmatpush1.msra.mxu0 0.0
        %488 = vmatprep.subr.mxu0 0.0
        %489 = vmatpush1.msra.mxu0 0.0
        %490 = vmatprep.subr.mxu0 0.0
        %491 = vmatpush1.msra.mxu0 0.0
        %492 = vmatprep.subr.mxu0 0.0
        %493 = vmatpush1.msra.mxu0 0.0
        %494 = vmatprep.subr.mxu0 0.0
        %495 = vmatpush1.msra.mxu0 0.0
        %496 = vmatprep.subr.mxu0 0.0
        %497 = vmatpush1.msra.mxu0 0.0
        %498 = vmatprep.subr.mxu0 0.0
        %499 = vmatpush1.msra.mxu0 0.0
        %500 = vmatprep.mubr.f32.mxu0 0.0
        %501 = vmatmul.mubr.f32.gmra.mrb[0].mxu0 %v389
        %v502 = vpop.f32.mrb[0].mxu0
        %v503 = vadd.f32 %v310, %v502
        %v504 = vpop.f32.mrb[0].mxu0
        %505 = vmatprep.mubr.f32.mxu0 0.0
        %506 = vmatmul.mubr.f32.gmra.mrb[0].mxu0 %v392
        %v507 = vpop.f32.mrb[0].mxu0
        %v508 = vadd.f32 %v315, %v507
        %v509 = vpop.f32.mrb[0].mxu0
        %510 = vmatprep.mubr.f32.mxu0 0.0
        %511 = vmatmul.mubr.f32.gmra.mrb[0].mxu0 %v395
        %v512 = vpop.f32.mrb[0].mxu0
        %v513 = vadd.f32 %v320, %v512
        %v514 = vpop.f32.mrb[0].mxu0
        %515 = vmatprep.mubr.f32.mxu0 0.0
        %516 = vmatmul.mubr.f32.gmra.mrb[0].mxu0 %v398
        %v517 = vpop.f32.mrb[0].mxu0
        %v518 = vadd.f32 %v325, %v517
        %v519 = vpop.f32.mrb[0].mxu0
        %520 = vmatprep.mubr.f32.mxu0 0.0
        %521 = vmatmul.mubr.f32.gmra.mrb[0].mxu0 %v401
        %v522 = vpop.f32.mrb[0].mxu0
        %v523 = vadd.f32 %v330, %v522
        %v524 = vpop.f32.mrb[0].mxu0
        %525 = vmatprep.mubr.f32.mxu0 0.0
        %526 = vmatmul.mubr.f32.gmra.mrb[0].mxu0 %v404
        %v527 = vpop.f32.mrb[0].mxu0
        %v528 = vadd.f32 %v335, %v527
        %v529 = vpop.f32.mrb[0].mxu0
        %530 = vmatprep.mubr.f32.mxu0 0.0
        %531 = vmatmul.mubr.f32.gmra.mrb[0].mxu0 %v407
        %v532 = vpop.f32.mrb[0].mxu0
        %v533 = vadd.f32 %v340, %v532
        %v534 = vpop.f32.mrb[0].mxu0
        %535 = vmatprep.mubr.f32.mxu0 0.0
        %536 = vmatmul.mubr.f32.gmra.mrb[0].mxu0 %v410
        %v537 = vpop.f32.mrb[0].mxu0
        %v538 = vadd.f32 %v345, %v537
        %v539 = vpop.f32.mrb[0].mxu0
        %540 = vmatprep.mubr.f32.mxu0 0.0
        %541 = vmatmul.mubr.f32.gmra.mrb[0].mxu0 %v413
        %v542 = vpop.f32.mrb[0].mxu0
        %v543 = vadd.f32 %v350, %v542
        %v544 = vpop.f32.mrb[0].mxu0
        %545 = vmatprep.mubr.f32.mxu0 0.0
        %546 = vmatmul.mubr.f32.gmra.mrb[0].mxu0 %v416
        %v547 = vpop.f32.mrb[0].mxu0
        %v548 = vadd.f32 %v355, %v547
        %v549 = vpop.f32.mrb[0].mxu0
        %550 = vmatprep.mubr.f32.mxu0 0.0
        %551 = vmatmul.mubr.f32.gmra.mrb[0].mxu0 %v419
        %v552 = vpop.f32.mrb[0].mxu0
        %v553 = vadd.f32 %v360, %v552
        %v554 = vpop.f32.mrb[0].mxu0
        %555 = vmatprep.mubr.f32.mxu0 0.0
        %556 = vmatmul.mubr.f32.gmra.mrb[0].mxu0 %v422
        %v557 = vpop.f32.mrb[0].mxu0
        %v558 = vadd.f32 %v365, %v557
        %v559 = vpop.f32.mrb[0].mxu0
        %560 = vmatprep.mubr.f32.mxu0 0.0
        %561 = vmatmul.mubr.f32.gmra.mrb[0].mxu0 %v425
        %v562 = vpop.f32.mrb[0].mxu0
        %v563 = vadd.f32 %v370, %v562
        %v564 = vpop.f32.mrb[0].mxu0
        %565 = vmatprep.mubr.f32.mxu0 0.0
        %566 = vmatmul.mubr.f32.gmra.mrb[0].mxu0 %v428
        %v567 = vpop.f32.mrb[0].mxu0
        %v568 = vadd.f32 %v375, %v567
        %v569 = vpop.f32.mrb[0].mxu0
        %570 = vmatprep.mubr.f32.mxu0 0.0
        %571 = vmatmul.mubr.f32.gmra.mrb[0].mxu0 %v431
        %v572 = vpop.f32.mrb[0].mxu0
        %v573 = vadd.f32 %v380, %v572
        %v574 = vpop.f32.mrb[0].mxu0
        %575 = vmatprep.mubr.f32.mxu0 0.0
        %576 = vmatmul.mubr.f32.gmra.mrb[0].mxu0 %v434
        %v577 = vpop.f32.mrb[0].mxu0
        %v578 = vadd.f32 %v385, %v577
        %v579 = vpop.f32.mrb[0].mxu0
        %580 = vdwg.mxu0
        %v581 = vld [vmem:[%s158 + $0x2] sm:$0xff]
        %v582 = vld [vmem:[%s158 + $0xa] sm:$0xff]
        %v583 = vld [vmem:[%s158 + $0x1a] sm:$0xff]
        %v584 = vld [vmem:[%s158 + $0x22] sm:$0xff]
        %v585 = vld [vmem:[%s158 + $0x32] sm:$0xff]
        %v586 = vld [vmem:[%s158 + $0x3a] sm:$0xff]
        %v587 = vld [vmem:[%s158 + $0x4a] sm:$0xff]
        %v588 = vld [vmem:[%s158 + $0x52] sm:$0xff]
        %v589 = vld [vmem:[%s158 + $0x62] sm:$0xff]
        %v590 = vld [vmem:[%s158 + $0x6a] sm:$0xff]
        %v591 = vld [vmem:[%s158 + $0x7a] sm:$0xff]
        %v592 = vld [vmem:[%s158 + $0x82] sm:$0xff]
        %v593 = vld [vmem:[%s158 + $0x92] sm:$0xff]
        %v594 = vld [vmem:[%s158 + $0x9a] sm:$0xff]
        %v595 = vld [vmem:[%s158 + $0xaa] sm:$0xff]
        %v596 = vld [vmem:[%s158 + $0xb2] sm:$0xff]
        %s597 = scalar_lea.vmem %s1, 16
        %v598 = vld [vmem:[%s597] sm:$0xff]
        %v600 = vsel %vm194, %v581, 0
        %v603 = vsel %vm194, %v582, 0
        %v606 = vsel %vm194, %v583, 0
        %v609 = vsel %vm194, %v584, 0
        %v612 = vsel %vm194, %v585, 0
        %v615 = vsel %vm194, %v586, 0
        %v618 = vsel %vm194, %v587, 0
        %v621 = vsel %vm194, %v588, 0
        %v624 = vsel %vm194, %v589, 0
        %v627 = vsel %vm194, %v590, 0
        %v630 = vsel %vm194, %v591, 0
        %v633 = vsel %vm194, %v592, 0
        %v636 = vsel %vm194, %v593, 0
        %v639 = vsel %vm194, %v594, 0
        %v642 = vsel %vm194, %v595, 0
        %v645 = vsel %vm194, %v596, 0
        %647 = vmatprep.subr.mxu0 0.0
        %648 = vmatpush1.msra.mxu0 %v598
        %649 = vmatprep.subr.mxu0 0.0
        %650 = vmatpush1.msra.mxu0 0.0
        %651 = vmatprep.subr.mxu0 0.0
        %652 = vmatpush1.msra.mxu0 0.0
        %653 = vmatprep.subr.mxu0 0.0
        %654 = vmatpush1.msra.mxu0 0.0
        %655 = vmatprep.subr.mxu0 0.0
        %656 = vmatpush1.msra.mxu0 0.0
        %657 = vmatprep.subr.mxu0 0.0
        %658 = vmatpush1.msra.mxu0 0.0
        %659 = vmatprep.subr.mxu0 0.0
        %660 = vmatpush1.msra.mxu0 0.0
        %661 = vmatprep.subr.mxu0 0.0
        %662 = vmatpush1.msra.mxu0 0.0
        %663 = vmatprep.subr.mxu0 0.0
        %664 = vmatpush1.msra.mxu0 0.0
        %665 = vmatprep.subr.mxu0 0.0
        %666 = vmatpush1.msra.mxu0 0.0
        %667 = vmatprep.subr.mxu0 0.0
        %668 = vmatpush1.msra.mxu0 0.0
        %669 = vmatprep.subr.mxu0 0.0
        %670 = vmatpush1.msra.mxu0 0.0
        %671 = vmatprep.subr.mxu0 0.0
        %672 = vmatpush1.msra.mxu0 0.0
        %673 = vmatprep.subr.mxu0 0.0
        %674 = vmatpush1.msra.mxu0 0.0
        %675 = vmatprep.subr.mxu0 0.0
        %676 = vmatpush1.msra.mxu0 0.0
        %677 = vmatprep.subr.mxu0 0.0
        %678 = vmatpush1.msra.mxu0 0.0
        %679 = vmatprep.subr.mxu0 0.0
        %680 = vmatpush1.msra.mxu0 0.0
        %681 = vmatprep.subr.mxu0 0.0
        %682 = vmatpush1.msra.mxu0 0.0
        %683 = vmatprep.subr.mxu0 0.0
        %684 = vmatpush1.msra.mxu0 0.0
        %685 = vmatprep.subr.mxu0 0.0
        %686 = vmatpush1.msra.mxu0 0.0
        %687 = vmatprep.subr.mxu0 0.0
        %688 = vmatpush1.msra.mxu0 0.0
        %689 = vmatprep.subr.mxu0 0.0
        %690 = vmatpush1.msra.mxu0 0.0
        %691 = vmatprep.subr.mxu0 0.0
        %692 = vmatpush1.msra.mxu0 0.0
        %693 = vmatprep.subr.mxu0 0.0
        %694 = vmatpush1.msra.mxu0 0.0
        %695 = vmatprep.subr.mxu0 0.0
        %696 = vmatpush1.msra.mxu0 0.0
        %697 = vmatprep.subr.mxu0 0.0
        %698 = vmatpush1.msra.mxu0 0.0
        %699 = vmatprep.subr.mxu0 0.0
        %700 = vmatpush1.msra.mxu0 0.0
        %701 = vmatprep.subr.mxu0 0.0
        %702 = vmatpush1.msra.mxu0 0.0
        %703 = vmatprep.subr.mxu0 0.0
        %704 = vmatpush1.msra.mxu0 0.0
        %705 = vmatprep.subr.mxu0 0.0
        %706 = vmatpush1.msra.mxu0 0.0
        %707 = vmatprep.subr.mxu0 0.0
        %708 = vmatpush1.msra.mxu0 0.0
        %709 = vmatprep.subr.mxu0 0.0
        %710 = vmatpush1.msra.mxu0 0.0
        %711 = vmatprep.mubr.f32.mxu0 0.0
        %712 = vmatmul.mubr.f32.gmra.mrb[0].mxu0 %v600
        %v713 = vpop.f32.mrb[0].mxu0
        %v714 = vadd.f32 0.0, %v713
        %v715 = vpop.f32.mrb[0].mxu0
        %716 = vmatprep.mubr.f32.mxu0 0.0
        %717 = vmatmul.mubr.f32.gmra.mrb[0].mxu0 %v603
        %v718 = vpop.f32.mrb[0].mxu0
        %v719 = vadd.f32 0.0, %v718
        %v720 = vpop.f32.mrb[0].mxu0
        %721 = vmatprep.mubr.f32.mxu0 0.0
        %722 = vmatmul.mubr.f32.gmra.mrb[0].mxu0 %v606
        %v723 = vpop.f32.mrb[0].mxu0
        %v724 = vadd.f32 0.0, %v723
        %v725 = vpop.f32.mrb[0].mxu0
        %726 = vmatprep.mubr.f32.mxu0 0.0
        %727 = vmatmul.mubr.f32.gmra.mrb[0].mxu0 %v609
        %v728 = vpop.f32.mrb[0].mxu0
        %v729 = vadd.f32 0.0, %v728
        %v730 = vpop.f32.mrb[0].mxu0
        %731 = vmatprep.mubr.f32.mxu0 0.0
        %732 = vmatmul.mubr.f32.gmra.mrb[0].mxu0 %v612
        %v733 = vpop.f32.mrb[0].mxu0
        %v734 = vadd.f32 0.0, %v733
        %v735 = vpop.f32.mrb[0].mxu0
        %736 = vmatprep.mubr.f32.mxu0 0.0
        %737 = vmatmul.mubr.f32.gmra.mrb[0].mxu0 %v615
        %v738 = vpop.f32.mrb[0].mxu0
        %v739 = vadd.f32 0.0, %v738
        %v740 = vpop.f32.mrb[0].mxu0
        %741 = vmatprep.mubr.f32.mxu0 0.0
        %742 = vmatmul.mubr.f32.gmra.mrb[0].mxu0 %v618
        %v743 = vpop.f32.mrb[0].mxu0
        %v744 = vadd.f32 0.0, %v743
        %v745 = vpop.f32.mrb[0].mxu0
        %746 = vmatprep.mubr.f32.mxu0 0.0
        %747 = vmatmul.mubr.f32.gmra.mrb[0].mxu0 %v621
        %v748 = vpop.f32.mrb[0].mxu0
        %v749 = vadd.f32 0.0, %v748
        %v750 = vpop.f32.mrb[0].mxu0
        %751 = vmatprep.mubr.f32.mxu0 0.0
        %752 = vmatmul.mubr.f32.gmra.mrb[0].mxu0 %v624
        %v753 = vpop.f32.mrb[0].mxu0
        %v754 = vadd.f32 0.0, %v753
        %v755 = vpop.f32.mrb[0].mxu0
        %756 = vmatprep.mubr.f32.mxu0 0.0
        %757 = vmatmul.mubr.f32.gmra.mrb[0].mxu0 %v627
        %v758 = vpop.f32.mrb[0].mxu0
        %v759 = vadd.f32 0.0, %v758
        %v760 = vpop.f32.mrb[0].mxu0
        %761 = vmatprep.mubr.f32.mxu0 0.0
        %762 = vmatmul.mubr.f32.gmra.mrb[0].mxu0 %v630
        %v763 = vpop.f32.mrb[0].mxu0
        %v764 = vadd.f32 0.0, %v763
        %v765 = vpop.f32.mrb[0].mxu0
        %766 = vmatprep.mubr.f32.mxu0 0.0
        %767 = vmatmul.mubr.f32.gmra.mrb[0].mxu0 %v633
        %v768 = vpop.f32.mrb[0].mxu0
        %v769 = vadd.f32 0.0, %v768
        %v770 = vpop.f32.mrb[0].mxu0
        %771 = vmatprep.mubr.f32.mxu0 0.0
        %772 = vmatmul.mubr.f32.gmra.mrb[0].mxu0 %v636
        %v773 = vpop.f32.mrb[0].mxu0
        %v774 = vadd.f32 0.0, %v773
        %v775 = vpop.f32.mrb[0].mxu0
        %776 = vmatprep.mubr.f32.mxu0 0.0
        %777 = vmatmul.mubr.f32.gmra.mrb[0].mxu0 %v639
        %v778 = vpop.f32.mrb[0].mxu0
        %v779 = vadd.f32 0.0, %v778
        %v780 = vpop.f32.mrb[0].mxu0
        %781 = vmatprep.mubr.f32.mxu0 0.0
        %782 = vmatmul.mubr.f32.gmra.mrb[0].mxu0 %v642
        %v783 = vpop.f32.mrb[0].mxu0
        %v784 = vadd.f32 0.0, %v783
        %v785 = vpop.f32.mrb[0].mxu0
        %786 = vmatprep.mubr.f32.mxu0 0.0
        %787 = vmatmul.mubr.f32.gmra.mrb[0].mxu0 %v645
        %v788 = vpop.f32.mrb[0].mxu0
        %v789 = vadd.f32 0.0, %v788
        %v790 = vpop.f32.mrb[0].mxu0
        %791 = vdwg.mxu0
        %v792 = vadd.f32 %v503, %v714
        %v793 = vadd.f32 %v508, %v719
        %v794 = vadd.f32 %v513, %v724
        %v795 = vadd.f32 %v518, %v729
        %v796 = vadd.f32 %v523, %v734
        %v797 = vadd.f32 %v528, %v739
        %v798 = vadd.f32 %v533, %v744
        %v799 = vadd.f32 %v538, %v749
        %v800 = vadd.f32 %v543, %v754
        %v801 = vadd.f32 %v548, %v759
        %v802 = vadd.f32 %v553, %v764
        %v803 = vadd.f32 %v558, %v769
        %v804 = vadd.f32 %v563, %v774
        %v805 = vadd.f32 %v568, %v779
        %v806 = vadd.f32 %v573, %v784
        %v807 = vadd.f32 %v578, %v789
        %s808 = sadd.s32 %s156, 1
        %s809 = smul.u32 %s808, 24
        %s810 = scalar_lea.vmem %s155, %s809
        %v811 = vld [vmem:[%s810] sm:$0xff]
        %v812 = vld [vmem:[%s810 + $0x8] sm:$0xff]
        %v813 = vld [vmem:[%s810 + $0x18] sm:$0xff]
        %v814 = vld [vmem:[%s810 + $0x20] sm:$0xff]
        %v815 = vld [vmem:[%s810 + $0x30] sm:$0xff]
        %v816 = vld [vmem:[%s810 + $0x38] sm:$0xff]
        %v817 = vld [vmem:[%s810 + $0x48] sm:$0xff]
        %v818 = vld [vmem:[%s810 + $0x50] sm:$0xff]
        %v819 = vld [vmem:[%s810 + $0x60] sm:$0xff]
        %v820 = vld [vmem:[%s810 + $0x68] sm:$0xff]
        %v821 = vld [vmem:[%s810 + $0x78] sm:$0xff]
        %v822 = vld [vmem:[%s810 + $0x80] sm:$0xff]
        %v823 = vld [vmem:[%s810 + $0x90] sm:$0xff]
        %v824 = vld [vmem:[%s810 + $0x98] sm:$0xff]
        %v825 = vld [vmem:[%s810 + $0xa8] sm:$0xff]
        %v826 = vld [vmem:[%s810 + $0xb0] sm:$0xff]
        %s827 = scalar_lea.vmem %s1, 24
        %v828 = vld [vmem:[%s827] sm:$0xff]
        %v830 = vsel %vm194, %v811, 0
        %v833 = vsel %vm194, %v812, 0
        %v836 = vsel %vm194, %v813, 0
        %v839 = vsel %vm194, %v814, 0
        %v842 = vsel %vm194, %v815, 0
        %v845 = vsel %vm194, %v816, 0
        %v848 = vsel %vm194, %v817, 0
        %v851 = vsel %vm194, %v818, 0
        %v854 = vsel %vm194, %v819, 0
        %v857 = vsel %vm194, %v820, 0
        %v860 = vsel %vm194, %v821, 0
        %v863 = vsel %vm194, %v822, 0
        %v866 = vsel %vm194, %v823, 0
        %v869 = vsel %vm194, %v824, 0
        %v872 = vsel %vm194, %v825, 0
        %v875 = vsel %vm194, %v826, 0
        %877 = vmatprep.subr.mxu0 0.0
        %878 = vmatpush1.msra.mxu0 %v828
        %879 = vmatprep.subr.mxu0 0.0
        %880 = vmatpush1.msra.mxu0 0.0
        %881 = vmatprep.subr.mxu0 0.0
        %882 = vmatpush1.msra.mxu0 0.0
        %883 = vmatprep.subr.mxu0 0.0
        %884 = vmatpush1.msra.mxu0 0.0
        %885 = vmatprep.subr.mxu0 0.0
        %886 = vmatpush1.msra.mxu0 0.0
        %887 = vmatprep.subr.mxu0 0.0
        %888 = vmatpush1.msra.mxu0 0.0
        %889 = vmatprep.subr.mxu0 0.0
        %890 = vmatpush1.msra.mxu0 0.0
        %891 = vmatprep.subr.mxu0 0.0
        %892 = vmatpush1.msra.mxu0 0.0
        %893 = vmatprep.subr.mxu0 0.0
        %894 = vmatpush1.msra.mxu0 0.0
        %895 = vmatprep.subr.mxu0 0.0
        %896 = vmatpush1.msra.mxu0 0.0
        %897 = vmatprep.subr.mxu0 0.0
        %898 = vmatpush1.msra.mxu0 0.0
        %899 = vmatprep.subr.mxu0 0.0
        %900 = vmatpush1.msra.mxu0 0.0
        %901 = vmatprep.subr.mxu0 0.0
        %902 = vmatpush1.msra.mxu0 0.0
        %903 = vmatprep.subr.mxu0 0.0
        %904 = vmatpush1.msra.mxu0 0.0
        %905 = vmatprep.subr.mxu0 0.0
        %906 = vmatpush1.msra.mxu0 0.0
        %907 = vmatprep.subr.mxu0 0.0
        %908 = vmatpush1.msra.mxu0 0.0
        %909 = vmatprep.subr.mxu0 0.0
        %910 = vmatpush1.msra.mxu0 0.0
        %911 = vmatprep.subr.mxu0 0.0
        %912 = vmatpush1.msra.mxu0 0.0
        %913 = vmatprep.subr.mxu0 0.0
        %914 = vmatpush1.msra.mxu0 0.0
        %915 = vmatprep.subr.mxu0 0.0
        %916 = vmatpush1.msra.mxu0 0.0
        %917 = vmatprep.subr.mxu0 0.0
        %918 = vmatpush1.msra.mxu0 0.0
        %919 = vmatprep.subr.mxu0 0.0
        %920 = vmatpush1.msra.mxu0 0.0
        %921 = vmatprep.subr.mxu0 0.0
        %922 = vmatpush1.msra.mxu0 0.0
        %923 = vmatprep.subr.mxu0 0.0
        %924 = vmatpush1.msra.mxu0 0.0
        %925 = vmatprep.subr.mxu0 0.0
        %926 = vmatpush1.msra.mxu0 0.0
        %927 = vmatprep.subr.mxu0 0.0
        %928 = vmatpush1.msra.mxu0 0.0
        %929 = vmatprep.subr.mxu0 0.0
        %930 = vmatpush1.msra.mxu0 0.0
        %931 = vmatprep.subr.mxu0 0.0
        %932 = vmatpush1.msra.mxu0 0.0
        %933 = vmatprep.subr.mxu0 0.0
        %934 = vmatpush1.msra.mxu0 0.0
        %935 = vmatprep.subr.mxu0 0.0
        %936 = vmatpush1.msra.mxu0 0.0
        %937 = vmatprep.subr.mxu0 0.0
        %938 = vmatpush1.msra.mxu0 0.0
        %939 = vmatprep.subr.mxu0 0.0
        %940 = vmatpush1.msra.mxu0 0.0
        %941 = vmatprep.mubr.f32.mxu0 0.0
        %942 = vmatmul.mubr.f32.gmra.mrb[0].mxu0 %v830
        %v943 = vpop.f32.mrb[0].mxu0
        %v944 = vadd.f32 0.0, %v943
        %v945 = vpop.f32.mrb[0].mxu0
        %946 = vmatprep.mubr.f32.mxu0 0.0
        %947 = vmatmul.mubr.f32.gmra.mrb[0].mxu0 %v833
        %v948 = vpop.f32.mrb[0].mxu0
        %v949 = vadd.f32 0.0, %v948
        %v950 = vpop.f32.mrb[0].mxu0
        %951 = vmatprep.mubr.f32.mxu0 0.0
        %952 = vmatmul.mubr.f32.gmra.mrb[0].mxu0 %v836
        %v953 = vpop.f32.mrb[0].mxu0
        %v954 = vadd.f32 0.0, %v953
        %v955 = vpop.f32.mrb[0].mxu0
        %956 = vmatprep.mubr.f32.mxu0 0.0
        %957 = vmatmul.mubr.f32.gmra.mrb[0].mxu0 %v839
        %v958 = vpop.f32.mrb[0].mxu0
        %v959 = vadd.f32 0.0, %v958
        %v960 = vpop.f32.mrb[0].mxu0
        %961 = vmatprep.mubr.f32.mxu0 0.0
        %962 = vmatmul.mubr.f32.gmra.mrb[0].mxu0 %v842
        %v963 = vpop.f32.mrb[0].mxu0
        %v964 = vadd.f32 0.0, %v963
        %v965 = vpop.f32.mrb[0].mxu0
        %966 = vmatprep.mubr.f32.mxu0 0.0
        %967 = vmatmul.mubr.f32.gmra.mrb[0].mxu0 %v845
        %v968 = vpop.f32.mrb[0].mxu0
        %v969 = vadd.f32 0.0, %v968
        %v970 = vpop.f32.mrb[0].mxu0
        %971 = vmatprep.mubr.f32.mxu0 0.0
        %972 = vmatmul.mubr.f32.gmra.mrb[0].mxu0 %v848
        %v973 = vpop.f32.mrb[0].mxu0
        %v974 = vadd.f32 0.0, %v973
        %v975 = vpop.f32.mrb[0].mxu0
        %976 = vmatprep.mubr.f32.mxu0 0.0
        %977 = vmatmul.mubr.f32.gmra.mrb[0].mxu0 %v851
        %v978 = vpop.f32.mrb[0].mxu0
        %v979 = vadd.f32 0.0, %v978
        %v980 = vpop.f32.mrb[0].mxu0
        %981 = vmatprep.mubr.f32.mxu0 0.0
        %982 = vmatmul.mubr.f32.gmra.mrb[0].mxu0 %v854
        %v983 = vpop.f32.mrb[0].mxu0
        %v984 = vadd.f32 0.0, %v983
        %v985 = vpop.f32.mrb[0].mxu0
        %986 = vmatprep.mubr.f32.mxu0 0.0
        %987 = vmatmul.mubr.f32.gmra.mrb[0].mxu0 %v857
        %v988 = vpop.f32.mrb[0].mxu0
        %v989 = vadd.f32 0.0, %v988
        %v990 = vpop.f32.mrb[0].mxu0
        %991 = vmatprep.mubr.f32.mxu0 0.0
        %992 = vmatmul.mubr.f32.gmra.mrb[0].mxu0 %v860
        %v993 = vpop.f32.mrb[0].mxu0
        %v994 = vadd.f32 0.0, %v993
        %v995 = vpop.f32.mrb[0].mxu0
        %996 = vmatprep.mubr.f32.mxu0 0.0
        %997 = vmatmul.mubr.f32.gmra.mrb[0].mxu0 %v863
        %v998 = vpop.f32.mrb[0].mxu0
        %v999 = vadd.f32 0.0, %v998
        %v1000 = vpop.f32.mrb[0].mxu0
        %1001 = vmatprep.mubr.f32.mxu0 0.0
        %1002 = vmatmul.mubr.f32.gmra.mrb[0].mxu0 %v866
        %v1003 = vpop.f32.mrb[0].mxu0
        %v1004 = vadd.f32 0.0, %v1003
        %v1005 = vpop.f32.mrb[0].mxu0
        %1006 = vmatprep.mubr.f32.mxu0 0.0
        %1007 = vmatmul.mubr.f32.gmra.mrb[0].mxu0 %v869
        %v1008 = vpop.f32.mrb[0].mxu0
        %v1009 = vadd.f32 0.0, %v1008
        %v1010 = vpop.f32.mrb[0].mxu0
        %1011 = vmatprep.mubr.f32.mxu0 0.0
        %1012 = vmatmul.mubr.f32.gmra.mrb[0].mxu0 %v872
        %v1013 = vpop.f32.mrb[0].mxu0
        %v1014 = vadd.f32 0.0, %v1013
        %v1015 = vpop.f32.mrb[0].mxu0
        %1016 = vmatprep.mubr.f32.mxu0 0.0
        %1017 = vmatmul.mubr.f32.gmra.mrb[0].mxu0 %v875
        %v1018 = vpop.f32.mrb[0].mxu0
        %v1019 = vadd.f32 0.0, %v1018
        %v1020 = vpop.f32.mrb[0].mxu0
        %1021 = vdwg.mxu0
        %v1022 = vadd.f32 %v792, %v944
        %v1023 = vadd.f32 %v793, %v949
        %v1024 = vadd.f32 %v794, %v954
        %v1025 = vadd.f32 %v795, %v959
        %v1026 = vadd.f32 %v796, %v964
        %v1027 = vadd.f32 %v797, %v969
        %v1028 = vadd.f32 %v798, %v974
        %v1029 = vadd.f32 %v799, %v979
        %v1030 = vadd.f32 %v800, %v984
        %v1031 = vadd.f32 %v801, %v989
        %v1032 = vadd.f32 %v802, %v994
        %v1033 = vadd.f32 %v803, %v999
        %v1034 = vadd.f32 %v804, %v1004
        %v1035 = vadd.f32 %v805, %v1009
        %v1036 = vadd.f32 %v806, %v1014
        %v1037 = vadd.f32 %v807, %v1019
        %v1038 = vld [vmem:[%s810 + $0x1] sm:$0xff]
        %v1039 = vld [vmem:[%s810 + $0x9] sm:$0xff]
        %v1040 = vld [vmem:[%s810 + $0x19] sm:$0xff]
        %v1041 = vld [vmem:[%s810 + $0x21] sm:$0xff]
        %v1042 = vld [vmem:[%s810 + $0x31] sm:$0xff]
        %v1043 = vld [vmem:[%s810 + $0x39] sm:$0xff]
        %v1044 = vld [vmem:[%s810 + $0x49] sm:$0xff]
        %v1045 = vld [vmem:[%s810 + $0x51] sm:$0xff]
        %v1046 = vld [vmem:[%s810 + $0x61] sm:$0xff]
        %v1047 = vld [vmem:[%s810 + $0x69] sm:$0xff]
        %v1048 = vld [vmem:[%s810 + $0x79] sm:$0xff]
        %v1049 = vld [vmem:[%s810 + $0x81] sm:$0xff]
        %v1050 = vld [vmem:[%s810 + $0x91] sm:$0xff]
        %v1051 = vld [vmem:[%s810 + $0x99] sm:$0xff]
        %v1052 = vld [vmem:[%s810 + $0xa9] sm:$0xff]
        %v1053 = vld [vmem:[%s810 + $0xb1] sm:$0xff]
        %s1054 = scalar_lea.vmem %s1, 32
        %v1055 = vld [vmem:[%s1054] sm:$0xff]
        %v1057 = vsel %vm194, %v1038, 0
        %v1060 = vsel %vm194, %v1039, 0
        %v1063 = vsel %vm194, %v1040, 0
        %v1066 = vsel %vm194, %v1041, 0
        %v1069 = vsel %vm194, %v1042, 0
        %v1072 = vsel %vm194, %v1043, 0
        %v1075 = vsel %vm194, %v1044, 0
        %v1078 = vsel %vm194, %v1045, 0
        %v1081 = vsel %vm194, %v1046, 0
        %v1084 = vsel %vm194, %v1047, 0
        %v1087 = vsel %vm194, %v1048, 0
        %v1090 = vsel %vm194, %v1049, 0
        %v1093 = vsel %vm194, %v1050, 0
        %v1096 = vsel %vm194, %v1051, 0
        %v1099 = vsel %vm194, %v1052, 0
        %v1102 = vsel %vm194, %v1053, 0
        %1104 = vmatprep.subr.mxu0 0.0
        %1105 = vmatpush1.msra.mxu0 %v1055
        %1106 = vmatprep.subr.mxu0 0.0
        %1107 = vmatpush1.msra.mxu0 0.0
        %1108 = vmatprep.subr.mxu0 0.0
        %1109 = vmatpush1.msra.mxu0 0.0
        %1110 = vmatprep.subr.mxu0 0.0
        %1111 = vmatpush1.msra.mxu0 0.0
        %1112 = vmatprep.subr.mxu0 0.0
        %1113 = vmatpush1.msra.mxu0 0.0
        %1114 = vmatprep.subr.mxu0 0.0
        %1115 = vmatpush1.msra.mxu0 0.0
        %1116 = vmatprep.subr.mxu0 0.0
        %1117 = vmatpush1.msra.mxu0 0.0
        %1118 = vmatprep.subr.mxu0 0.0
        %1119 = vmatpush1.msra.mxu0 0.0
        %1120 = vmatprep.subr.mxu0 0.0
        %1121 = vmatpush1.msra.mxu0 0.0
        %1122 = vmatprep.subr.mxu0 0.0
        %1123 = vmatpush1.msra.mxu0 0.0
        %1124 = vmatprep.subr.mxu0 0.0
        %1125 = vmatpush1.msra.mxu0 0.0
        %1126 = vmatprep.subr.mxu0 0.0
        %1127 = vmatpush1.msra.mxu0 0.0
        %1128 = vmatprep.subr.mxu0 0.0
        %1129 = vmatpush1.msra.mxu0 0.0
        %1130 = vmatprep.subr.mxu0 0.0
        %1131 = vmatpush1.msra.mxu0 0.0
        %1132 = vmatprep.subr.mxu0 0.0
        %1133 = vmatpush1.msra.mxu0 0.0
        %1134 = vmatprep.subr.mxu0 0.0
        %1135 = vmatpush1.msra.mxu0 0.0
        %1136 = vmatprep.subr.mxu0 0.0
        %1137 = vmatpush1.msra.mxu0 0.0
        %1138 = vmatprep.subr.mxu0 0.0
        %1139 = vmatpush1.msra.mxu0 0.0
        %1140 = vmatprep.subr.mxu0 0.0
        %1141 = vmatpush1.msra.mxu0 0.0
        %1142 = vmatprep.subr.mxu0 0.0
        %1143 = vmatpush1.msra.mxu0 0.0
        %1144 = vmatprep.subr.mxu0 0.0
        %1145 = vmatpush1.msra.mxu0 0.0
        %1146 = vmatprep.subr.mxu0 0.0
        %1147 = vmatpush1.msra.mxu0 0.0
        %1148 = vmatprep.subr.mxu0 0.0
        %1149 = vmatpush1.msra.mxu0 0.0
        %1150 = vmatprep.subr.mxu0 0.0
        %1151 = vmatpush1.msra.mxu0 0.0
        %1152 = vmatprep.subr.mxu0 0.0
        %1153 = vmatpush1.msra.mxu0 0.0
        %1154 = vmatprep.subr.mxu0 0.0
        %1155 = vmatpush1.msra.mxu0 0.0
        %1156 = vmatprep.subr.mxu0 0.0
        %1157 = vmatpush1.msra.mxu0 0.0
        %1158 = vmatprep.subr.mxu0 0.0
        %1159 = vmatpush1.msra.mxu0 0.0
        %1160 = vmatprep.subr.mxu0 0.0
        %1161 = vmatpush1.msra.mxu0 0.0
        %1162 = vmatprep.subr.mxu0 0.0
        %1163 = vmatpush1.msra.mxu0 0.0
        %1164 = vmatprep.subr.mxu0 0.0
        %1165 = vmatpush1.msra.mxu0 0.0
        %1166 = vmatprep.subr.mxu0 0.0
        %1167 = vmatpush1.msra.mxu0 0.0
        %1168 = vmatprep.mubr.f32.mxu0 0.0
        %1169 = vmatmul.mubr.f32.gmra.mrb[0].mxu0 %v1057
        %v1170 = vpop.f32.mrb[0].mxu0
        %v1171 = vadd.f32 0.0, %v1170
        %v1172 = vpop.f32.mrb[0].mxu0
        %1173 = vmatprep.mubr.f32.mxu0 0.0
        %1174 = vmatmul.mubr.f32.gmra.mrb[0].mxu0 %v1060
        %v1175 = vpop.f32.mrb[0].mxu0
        %v1176 = vadd.f32 0.0, %v1175
        %v1177 = vpop.f32.mrb[0].mxu0
        %1178 = vmatprep.mubr.f32.mxu0 0.0
        %1179 = vmatmul.mubr.f32.gmra.mrb[0].mxu0 %v1063
        %v1180 = vpop.f32.mrb[0].mxu0
        %v1181 = vadd.f32 0.0, %v1180
        %v1182 = vpop.f32.mrb[0].mxu0
        %1183 = vmatprep.mubr.f32.mxu0 0.0
        %1184 = vmatmul.mubr.f32.gmra.mrb[0].mxu0 %v1066
        %v1185 = vpop.f32.mrb[0].mxu0
        %v1186 = vadd.f32 0.0, %v1185
        %v1187 = vpop.f32.mrb[0].mxu0
        %1188 = vmatprep.mubr.f32.mxu0 0.0
        %1189 = vmatmul.mubr.f32.gmra.mrb[0].mxu0 %v1069
        %v1190 = vpop.f32.mrb[0].mxu0
        %v1191 = vadd.f32 0.0, %v1190
        %v1192 = vpop.f32.mrb[0].mxu0
        %1193 = vmatprep.mubr.f32.mxu0 0.0
        %1194 = vmatmul.mubr.f32.gmra.mrb[0].mxu0 %v1072
        %v1195 = vpop.f32.mrb[0].mxu0
        %v1196 = vadd.f32 0.0, %v1195
        %v1197 = vpop.f32.mrb[0].mxu0
        %1198 = vmatprep.mubr.f32.mxu0 0.0
        %1199 = vmatmul.mubr.f32.gmra.mrb[0].mxu0 %v1075
        %v1200 = vpop.f32.mrb[0].mxu0
        %v1201 = vadd.f32 0.0, %v1200
        %v1202 = vpop.f32.mrb[0].mxu0
        %1203 = vmatprep.mubr.f32.mxu0 0.0
        %1204 = vmatmul.mubr.f32.gmra.mrb[0].mxu0 %v1078
        %v1205 = vpop.f32.mrb[0].mxu0
        %v1206 = vadd.f32 0.0, %v1205
        %v1207 = vpop.f32.mrb[0].mxu0
        %1208 = vmatprep.mubr.f32.mxu0 0.0
        %1209 = vmatmul.mubr.f32.gmra.mrb[0].mxu0 %v1081
        %v1210 = vpop.f32.mrb[0].mxu0
        %v1211 = vadd.f32 0.0, %v1210
        %v1212 = vpop.f32.mrb[0].mxu0
        %1213 = vmatprep.mubr.f32.mxu0 0.0
        %1214 = vmatmul.mubr.f32.gmra.mrb[0].mxu0 %v1084
        %v1215 = vpop.f32.mrb[0].mxu0
        %v1216 = vadd.f32 0.0, %v1215
        %v1217 = vpop.f32.mrb[0].mxu0
        %1218 = vmatprep.mubr.f32.mxu0 0.0
        %1219 = vmatmul.mubr.f32.gmra.mrb[0].mxu0 %v1087
        %v1220 = vpop.f32.mrb[0].mxu0
        %v1221 = vadd.f32 0.0, %v1220
        %v1222 = vpop.f32.mrb[0].mxu0
        %1223 = vmatprep.mubr.f32.mxu0 0.0
        %1224 = vmatmul.mubr.f32.gmra.mrb[0].mxu0 %v1090
        %v1225 = vpop.f32.mrb[0].mxu0
        %v1226 = vadd.f32 0.0, %v1225
        %v1227 = vpop.f32.mrb[0].mxu0
        %1228 = vmatprep.mubr.f32.mxu0 0.0
        %1229 = vmatmul.mubr.f32.gmra.mrb[0].mxu0 %v1093
        %v1230 = vpop.f32.mrb[0].mxu0
        %v1231 = vadd.f32 0.0, %v1230
        %v1232 = vpop.f32.mrb[0].mxu0
        %1233 = vmatprep.mubr.f32.mxu0 0.0
        %1234 = vmatmul.mubr.f32.gmra.mrb[0].mxu0 %v1096
        %v1235 = vpop.f32.mrb[0].mxu0
        %v1236 = vadd.f32 0.0, %v1235
        %v1237 = vpop.f32.mrb[0].mxu0
        %1238 = vmatprep.mubr.f32.mxu0 0.0
        %1239 = vmatmul.mubr.f32.gmra.mrb[0].mxu0 %v1099
        %v1240 = vpop.f32.mrb[0].mxu0
        %v1241 = vadd.f32 0.0, %v1240
        %v1242 = vpop.f32.mrb[0].mxu0
        %1243 = vmatprep.mubr.f32.mxu0 0.0
        %1244 = vmatmul.mubr.f32.gmra.mrb[0].mxu0 %v1102
        %v1245 = vpop.f32.mrb[0].mxu0
        %v1246 = vadd.f32 0.0, %v1245
        %v1247 = vpop.f32.mrb[0].mxu0
        %1248 = vdwg.mxu0
        %v1249 = vadd.f32 %v1022, %v1171
        %v1250 = vadd.f32 %v1023, %v1176
        %v1251 = vadd.f32 %v1024, %v1181
        %v1252 = vadd.f32 %v1025, %v1186
        %v1253 = vadd.f32 %v1026, %v1191
        %v1254 = vadd.f32 %v1027, %v1196
        %v1255 = vadd.f32 %v1028, %v1201
        %v1256 = vadd.f32 %v1029, %v1206
        %v1257 = vadd.f32 %v1030, %v1211
        %v1258 = vadd.f32 %v1031, %v1216
        %v1259 = vadd.f32 %v1032, %v1221
        %v1260 = vadd.f32 %v1033, %v1226
        %v1261 = vadd.f32 %v1034, %v1231
        %v1262 = vadd.f32 %v1035, %v1236
        %v1263 = vadd.f32 %v1036, %v1241
        %v1264 = vadd.f32 %v1037, %v1246
        %v1265 = vld [vmem:[%s810 + $0x2] sm:$0xff]
        %v1266 = vld [vmem:[%s810 + $0xa] sm:$0xff]
        %v1267 = vld [vmem:[%s810 + $0x1a] sm:$0xff]
        %v1268 = vld [vmem:[%s810 + $0x22] sm:$0xff]
        %v1269 = vld [vmem:[%s810 + $0x32] sm:$0xff]
        %v1270 = vld [vmem:[%s810 + $0x3a] sm:$0xff]
        %v1271 = vld [vmem:[%s810 + $0x4a] sm:$0xff]
        %v1272 = vld [vmem:[%s810 + $0x52] sm:$0xff]
        %v1273 = vld [vmem:[%s810 + $0x62] sm:$0xff]
        %v1274 = vld [vmem:[%s810 + $0x6a] sm:$0xff]
        %v1275 = vld [vmem:[%s810 + $0x7a] sm:$0xff]
        %v1276 = vld [vmem:[%s810 + $0x82] sm:$0xff]
        %v1277 = vld [vmem:[%s810 + $0x92] sm:$0xff]
        %v1278 = vld [vmem:[%s810 + $0x9a] sm:$0xff]
        %v1279 = vld [vmem:[%s810 + $0xaa] sm:$0xff]
        %v1280 = vld [vmem:[%s810 + $0xb2] sm:$0xff]
        %s1281 = scalar_lea.vmem %s1, 40
        %v1282 = vld [vmem:[%s1281] sm:$0xff]
        %v1284 = vsel %vm194, %v1265, 0
        %v1287 = vsel %vm194, %v1266, 0
        %v1290 = vsel %vm194, %v1267, 0
        %v1293 = vsel %vm194, %v1268, 0
        %v1296 = vsel %vm194, %v1269, 0
        %v1299 = vsel %vm194, %v1270, 0
        %v1302 = vsel %vm194, %v1271, 0
        %v1305 = vsel %vm194, %v1272, 0
        %v1308 = vsel %vm194, %v1273, 0
        %v1311 = vsel %vm194, %v1274, 0
        %v1314 = vsel %vm194, %v1275, 0
        %v1317 = vsel %vm194, %v1276, 0
        %v1320 = vsel %vm194, %v1277, 0
        %v1323 = vsel %vm194, %v1278, 0
        %v1326 = vsel %vm194, %v1279, 0
        %v1329 = vsel %vm194, %v1280, 0
        %1331 = vmatprep.subr.mxu0 0.0
        %1332 = vmatpush1.msra.mxu0 %v1282
        %1333 = vmatprep.subr.mxu0 0.0
        %1334 = vmatpush1.msra.mxu0 0.0
        %1335 = vmatprep.subr.mxu0 0.0
        %1336 = vmatpush1.msra.mxu0 0.0
        %1337 = vmatprep.subr.mxu0 0.0
        %1338 = vmatpush1.msra.mxu0 0.0
        %1339 = vmatprep.subr.mxu0 0.0
        %1340 = vmatpush1.msra.mxu0 0.0
        %1341 = vmatprep.subr.mxu0 0.0
        %1342 = vmatpush1.msra.mxu0 0.0
        %1343 = vmatprep.subr.mxu0 0.0
        %1344 = vmatpush1.msra.mxu0 0.0
        %1345 = vmatprep.subr.mxu0 0.0
        %1346 = vmatpush1.msra.mxu0 0.0
        %1347 = vmatprep.subr.mxu0 0.0
        %1348 = vmatpush1.msra.mxu0 0.0
        %1349 = vmatprep.subr.mxu0 0.0
        %1350 = vmatpush1.msra.mxu0 0.0
        %1351 = vmatprep.subr.mxu0 0.0
        %1352 = vmatpush1.msra.mxu0 0.0
        %1353 = vmatprep.subr.mxu0 0.0
        %1354 = vmatpush1.msra.mxu0 0.0
        %1355 = vmatprep.subr.mxu0 0.0
        %1356 = vmatpush1.msra.mxu0 0.0
        %1357 = vmatprep.subr.mxu0 0.0
        %1358 = vmatpush1.msra.mxu0 0.0
        %1359 = vmatprep.subr.mxu0 0.0
        %1360 = vmatpush1.msra.mxu0 0.0
        %1361 = vmatprep.subr.mxu0 0.0
        %1362 = vmatpush1.msra.mxu0 0.0
        %1363 = vmatprep.subr.mxu0 0.0
        %1364 = vmatpush1.msra.mxu0 0.0
        %1365 = vmatprep.subr.mxu0 0.0
        %1366 = vmatpush1.msra.mxu0 0.0
        %1367 = vmatprep.subr.mxu0 0.0
        %1368 = vmatpush1.msra.mxu0 0.0
        %1369 = vmatprep.subr.mxu0 0.0
        %1370 = vmatpush1.msra.mxu0 0.0
        %1371 = vmatprep.subr.mxu0 0.0
        %1372 = vmatpush1.msra.mxu0 0.0
        %1373 = vmatprep.subr.mxu0 0.0
        %1374 = vmatpush1.msra.mxu0 0.0
        %1375 = vmatprep.subr.mxu0 0.0
        %1376 = vmatpush1.msra.mxu0 0.0
        %1377 = vmatprep.subr.mxu0 0.0
        %1378 = vmatpush1.msra.mxu0 0.0
        %1379 = vmatprep.subr.mxu0 0.0
        %1380 = vmatpush1.msra.mxu0 0.0
        %1381 = vmatprep.subr.mxu0 0.0
        %1382 = vmatpush1.msra.mxu0 0.0
        %1383 = vmatprep.subr.mxu0 0.0
        %1384 = vmatpush1.msra.mxu0 0.0
        %1385 = vmatprep.subr.mxu0 0.0
        %1386 = vmatpush1.msra.mxu0 0.0
        %1387 = vmatprep.subr.mxu0 0.0
        %1388 = vmatpush1.msra.mxu0 0.0
        %1389 = vmatprep.subr.mxu0 0.0
        %1390 = vmatpush1.msra.mxu0 0.0
        %1391 = vmatprep.subr.mxu0 0.0
        %1392 = vmatpush1.msra.mxu0 0.0
        %1393 = vmatprep.subr.mxu0 0.0
        %1394 = vmatpush1.msra.mxu0 0.0
        %1395 = vmatprep.mubr.f32.mxu0 0.0
        %1396 = vmatmul.mubr.f32.gmra.mrb[0].mxu0 %v1284
        %v1397 = vpop.f32.mrb[0].mxu0
        %v1398 = vadd.f32 0.0, %v1397
        %v1399 = vpop.f32.mrb[0].mxu0
        %1400 = vmatprep.mubr.f32.mxu0 0.0
        %1401 = vmatmul.mubr.f32.gmra.mrb[0].mxu0 %v1287
        %v1402 = vpop.f32.mrb[0].mxu0
        %v1403 = vadd.f32 0.0, %v1402
        %v1404 = vpop.f32.mrb[0].mxu0
        %1405 = vmatprep.mubr.f32.mxu0 0.0
        %1406 = vmatmul.mubr.f32.gmra.mrb[0].mxu0 %v1290
        %v1407 = vpop.f32.mrb[0].mxu0
        %v1408 = vadd.f32 0.0, %v1407
        %v1409 = vpop.f32.mrb[0].mxu0
        %1410 = vmatprep.mubr.f32.mxu0 0.0
        %1411 = vmatmul.mubr.f32.gmra.mrb[0].mxu0 %v1293
        %v1412 = vpop.f32.mrb[0].mxu0
        %v1413 = vadd.f32 0.0, %v1412
        %v1414 = vpop.f32.mrb[0].mxu0
        %1415 = vmatprep.mubr.f32.mxu0 0.0
        %1416 = vmatmul.mubr.f32.gmra.mrb[0].mxu0 %v1296
        %v1417 = vpop.f32.mrb[0].mxu0
        %v1418 = vadd.f32 0.0, %v1417
        %v1419 = vpop.f32.mrb[0].mxu0
        %1420 = vmatprep.mubr.f32.mxu0 0.0
        %1421 = vmatmul.mubr.f32.gmra.mrb[0].mxu0 %v1299
        %v1422 = vpop.f32.mrb[0].mxu0
        %v1423 = vadd.f32 0.0, %v1422
        %v1424 = vpop.f32.mrb[0].mxu0
        %1425 = vmatprep.mubr.f32.mxu0 0.0
        %1426 = vmatmul.mubr.f32.gmra.mrb[0].mxu0 %v1302
        %v1427 = vpop.f32.mrb[0].mxu0
        %v1428 = vadd.f32 0.0, %v1427
        %v1429 = vpop.f32.mrb[0].mxu0
        %1430 = vmatprep.mubr.f32.mxu0 0.0
        %1431 = vmatmul.mubr.f32.gmra.mrb[0].mxu0 %v1305
        %v1432 = vpop.f32.mrb[0].mxu0
        %v1433 = vadd.f32 0.0, %v1432
        %v1434 = vpop.f32.mrb[0].mxu0
        %1435 = vmatprep.mubr.f32.mxu0 0.0
        %1436 = vmatmul.mubr.f32.gmra.mrb[0].mxu0 %v1308
        %v1437 = vpop.f32.mrb[0].mxu0
        %v1438 = vadd.f32 0.0, %v1437
        %v1439 = vpop.f32.mrb[0].mxu0
        %1440 = vmatprep.mubr.f32.mxu0 0.0
        %1441 = vmatmul.mubr.f32.gmra.mrb[0].mxu0 %v1311
        %v1442 = vpop.f32.mrb[0].mxu0
        %v1443 = vadd.f32 0.0, %v1442
        %v1444 = vpop.f32.mrb[0].mxu0
        %1445 = vmatprep.mubr.f32.mxu0 0.0
        %1446 = vmatmul.mubr.f32.gmra.mrb[0].mxu0 %v1314
        %v1447 = vpop.f32.mrb[0].mxu0
        %v1448 = vadd.f32 0.0, %v1447
        %v1449 = vpop.f32.mrb[0].mxu0
        %1450 = vmatprep.mubr.f32.mxu0 0.0
        %1451 = vmatmul.mubr.f32.gmra.mrb[0].mxu0 %v1317
        %v1452 = vpop.f32.mrb[0].mxu0
        %v1453 = vadd.f32 0.0, %v1452
        %v1454 = vpop.f32.mrb[0].mxu0
        %1455 = vmatprep.mubr.f32.mxu0 0.0
        %1456 = vmatmul.mubr.f32.gmra.mrb[0].mxu0 %v1320
        %v1457 = vpop.f32.mrb[0].mxu0
        %v1458 = vadd.f32 0.0, %v1457
        %v1459 = vpop.f32.mrb[0].mxu0
        %1460 = vmatprep.mubr.f32.mxu0 0.0
        %1461 = vmatmul.mubr.f32.gmra.mrb[0].mxu0 %v1323
        %v1462 = vpop.f32.mrb[0].mxu0
        %v1463 = vadd.f32 0.0, %v1462
        %v1464 = vpop.f32.mrb[0].mxu0
        %1465 = vmatprep.mubr.f32.mxu0 0.0
        %1466 = vmatmul.mubr.f32.gmra.mrb[0].mxu0 %v1326
        %v1467 = vpop.f32.mrb[0].mxu0
        %v1468 = vadd.f32 0.0, %v1467
        %v1469 = vpop.f32.mrb[0].mxu0
        %1470 = vmatprep.mubr.f32.mxu0 0.0
        %1471 = vmatmul.mubr.f32.gmra.mrb[0].mxu0 %v1329
        %v1472 = vpop.f32.mrb[0].mxu0
        %v1473 = vadd.f32 0.0, %v1472
        %v1474 = vpop.f32.mrb[0].mxu0
        %1475 = vdwg.mxu0
        %v1476 = vadd.f32 %v1249, %v1398
        %v1477 = vadd.f32 %v1250, %v1403
        %v1478 = vadd.f32 %v1251, %v1408
        %v1479 = vadd.f32 %v1252, %v1413
        %v1480 = vadd.f32 %v1253, %v1418
        %v1481 = vadd.f32 %v1254, %v1423
        %v1482 = vadd.f32 %v1255, %v1428
        %v1483 = vadd.f32 %v1256, %v1433
        %v1484 = vadd.f32 %v1257, %v1438
        %v1485 = vadd.f32 %v1258, %v1443
        %v1486 = vadd.f32 %v1259, %v1448
        %v1487 = vadd.f32 %v1260, %v1453
        %v1488 = vadd.f32 %v1261, %v1458
        %v1489 = vadd.f32 %v1262, %v1463
        %v1490 = vadd.f32 %v1263, %v1468
        %v1491 = vadd.f32 %v1264, %v1473
        %s1492 = sadd.s32 %s156, 2
        %s1493 = smul.u32 %s1492, 24
        %s1494 = scalar_lea.vmem %s155, %s1493
        %v1495 = vld [vmem:[%s1494] sm:$0xff]
        %v1496 = vld [vmem:[%s1494 + $0x8] sm:$0xff]
        %v1497 = vld [vmem:[%s1494 + $0x18] sm:$0xff]
        %v1498 = vld [vmem:[%s1494 + $0x20] sm:$0xff]
        %v1499 = vld [vmem:[%s1494 + $0x30] sm:$0xff]
        %v1500 = vld [vmem:[%s1494 + $0x38] sm:$0xff]
        %v1501 = vld [vmem:[%s1494 + $0x48] sm:$0xff]
        %v1502 = vld [vmem:[%s1494 + $0x50] sm:$0xff]
        %v1503 = vld [vmem:[%s1494 + $0x60] sm:$0xff]
        %v1504 = vld [vmem:[%s1494 + $0x68] sm:$0xff]
        %v1505 = vld [vmem:[%s1494 + $0x78] sm:$0xff]
        %v1506 = vld [vmem:[%s1494 + $0x80] sm:$0xff]
        %v1507 = vld [vmem:[%s1494 + $0x90] sm:$0xff]
        %v1508 = vld [vmem:[%s1494 + $0x98] sm:$0xff]
        %v1509 = vld [vmem:[%s1494 + $0xa8] sm:$0xff]
        %v1510 = vld [vmem:[%s1494 + $0xb0] sm:$0xff]
        %s1511 = scalar_lea.vmem %s1, 48
        %v1512 = vld [vmem:[%s1511] sm:$0xff]
        %v1514 = vsel %vm194, %v1495, 0
        %v1517 = vsel %vm194, %v1496, 0
        %v1520 = vsel %vm194, %v1497, 0
        %v1523 = vsel %vm194, %v1498, 0
        %v1526 = vsel %vm194, %v1499, 0
        %v1529 = vsel %vm194, %v1500, 0
        %v1532 = vsel %vm194, %v1501, 0
        %v1535 = vsel %vm194, %v1502, 0
        %v1538 = vsel %vm194, %v1503, 0
        %v1541 = vsel %vm194, %v1504, 0
        %v1544 = vsel %vm194, %v1505, 0
        %v1547 = vsel %vm194, %v1506, 0
        %v1550 = vsel %vm194, %v1507, 0
        %v1553 = vsel %vm194, %v1508, 0
        %v1556 = vsel %vm194, %v1509, 0
        %v1559 = vsel %vm194, %v1510, 0
        %1561 = vmatprep.subr.mxu0 0.0
        %1562 = vmatpush1.msra.mxu0 %v1512
        %1563 = vmatprep.subr.mxu0 0.0
        %1564 = vmatpush1.msra.mxu0 0.0
        %1565 = vmatprep.subr.mxu0 0.0
        %1566 = vmatpush1.msra.mxu0 0.0
        %1567 = vmatprep.subr.mxu0 0.0
        %1568 = vmatpush1.msra.mxu0 0.0
        %1569 = vmatprep.subr.mxu0 0.0
        %1570 = vmatpush1.msra.mxu0 0.0
        %1571 = vmatprep.subr.mxu0 0.0
        %1572 = vmatpush1.msra.mxu0 0.0
        %1573 = vmatprep.subr.mxu0 0.0
        %1574 = vmatpush1.msra.mxu0 0.0
        %1575 = vmatprep.subr.mxu0 0.0
        %1576 = vmatpush1.msra.mxu0 0.0
        %1577 = vmatprep.subr.mxu0 0.0
        %1578 = vmatpush1.msra.mxu0 0.0
        %1579 = vmatprep.subr.mxu0 0.0
        %1580 = vmatpush1.msra.mxu0 0.0
        %1581 = vmatprep.subr.mxu0 0.0
        %1582 = vmatpush1.msra.mxu0 0.0
        %1583 = vmatprep.subr.mxu0 0.0
        %1584 = vmatpush1.msra.mxu0 0.0
        %1585 = vmatprep.subr.mxu0 0.0
        %1586 = vmatpush1.msra.mxu0 0.0
        %1587 = vmatprep.subr.mxu0 0.0
        %1588 = vmatpush1.msra.mxu0 0.0
        %1589 = vmatprep.subr.mxu0 0.0
        %1590 = vmatpush1.msra.mxu0 0.0
        %1591 = vmatprep.subr.mxu0 0.0
        %1592 = vmatpush1.msra.mxu0 0.0
        %1593 = vmatprep.subr.mxu0 0.0
        %1594 = vmatpush1.msra.mxu0 0.0
        %1595 = vmatprep.subr.mxu0 0.0
        %1596 = vmatpush1.msra.mxu0 0.0
        %1597 = vmatprep.subr.mxu0 0.0
        %1598 = vmatpush1.msra.mxu0 0.0
        %1599 = vmatprep.subr.mxu0 0.0
        %1600 = vmatpush1.msra.mxu0 0.0
        %1601 = vmatprep.subr.mxu0 0.0
        %1602 = vmatpush1.msra.mxu0 0.0
        %1603 = vmatprep.subr.mxu0 0.0
        %1604 = vmatpush1.msra.mxu0 0.0
        %1605 = vmatprep.subr.mxu0 0.0
        %1606 = vmatpush1.msra.mxu0 0.0
        %1607 = vmatprep.subr.mxu0 0.0
        %1608 = vmatpush1.msra.mxu0 0.0
        %1609 = vmatprep.subr.mxu0 0.0
        %1610 = vmatpush1.msra.mxu0 0.0
        %1611 = vmatprep.subr.mxu0 0.0
        %1612 = vmatpush1.msra.mxu0 0.0
        %1613 = vmatprep.subr.mxu0 0.0
        %1614 = vmatpush1.msra.mxu0 0.0
        %1615 = vmatprep.subr.mxu0 0.0
        %1616 = vmatpush1.msra.mxu0 0.0
        %1617 = vmatprep.subr.mxu0 0.0
        %1618 = vmatpush1.msra.mxu0 0.0
        %1619 = vmatprep.subr.mxu0 0.0
        %1620 = vmatpush1.msra.mxu0 0.0
        %1621 = vmatprep.subr.mxu0 0.0
        %1622 = vmatpush1.msra.mxu0 0.0
        %1623 = vmatprep.subr.mxu0 0.0
        %1624 = vmatpush1.msra.mxu0 0.0
        %1625 = vmatprep.mubr.f32.mxu0 0.0
        %1626 = vmatmul.mubr.f32.gmra.mrb[0].mxu0 %v1514
        %v1627 = vpop.f32.mrb[0].mxu0
        %v1628 = vadd.f32 0.0, %v1627
        %v1629 = vpop.f32.mrb[0].mxu0
        %1630 = vmatprep.mubr.f32.mxu0 0.0
        %1631 = vmatmul.mubr.f32.gmra.mrb[0].mxu0 %v1517
        %v1632 = vpop.f32.mrb[0].mxu0
        %v1633 = vadd.f32 0.0, %v1632
        %v1634 = vpop.f32.mrb[0].mxu0
        %1635 = vmatprep.mubr.f32.mxu0 0.0
        %1636 = vmatmul.mubr.f32.gmra.mrb[0].mxu0 %v1520
        %v1637 = vpop.f32.mrb[0].mxu0
        %v1638 = vadd.f32 0.0, %v1637
        %v1639 = vpop.f32.mrb[0].mxu0
        %1640 = vmatprep.mubr.f32.mxu0 0.0
        %1641 = vmatmul.mubr.f32.gmra.mrb[0].mxu0 %v1523
        %v1642 = vpop.f32.mrb[0].mxu0
        %v1643 = vadd.f32 0.0, %v1642
        %v1644 = vpop.f32.mrb[0].mxu0
        %1645 = vmatprep.mubr.f32.mxu0 0.0
        %1646 = vmatmul.mubr.f32.gmra.mrb[0].mxu0 %v1526
        %v1647 = vpop.f32.mrb[0].mxu0
        %v1648 = vadd.f32 0.0, %v1647
        %v1649 = vpop.f32.mrb[0].mxu0
        %1650 = vmatprep.mubr.f32.mxu0 0.0
        %1651 = vmatmul.mubr.f32.gmra.mrb[0].mxu0 %v1529
        %v1652 = vpop.f32.mrb[0].mxu0
        %v1653 = vadd.f32 0.0, %v1652
        %v1654 = vpop.f32.mrb[0].mxu0
        %1655 = vmatprep.mubr.f32.mxu0 0.0
        %1656 = vmatmul.mubr.f32.gmra.mrb[0].mxu0 %v1532
        %v1657 = vpop.f32.mrb[0].mxu0
        %v1658 = vadd.f32 0.0, %v1657
        %v1659 = vpop.f32.mrb[0].mxu0
        %1660 = vmatprep.mubr.f32.mxu0 0.0
        %1661 = vmatmul.mubr.f32.gmra.mrb[0].mxu0 %v1535
        %v1662 = vpop.f32.mrb[0].mxu0
        %v1663 = vadd.f32 0.0, %v1662
        %v1664 = vpop.f32.mrb[0].mxu0
        %1665 = vmatprep.mubr.f32.mxu0 0.0
        %1666 = vmatmul.mubr.f32.gmra.mrb[0].mxu0 %v1538
        %v1667 = vpop.f32.mrb[0].mxu0
        %v1668 = vadd.f32 0.0, %v1667
        %v1669 = vpop.f32.mrb[0].mxu0
        %1670 = vmatprep.mubr.f32.mxu0 0.0
        %1671 = vmatmul.mubr.f32.gmra.mrb[0].mxu0 %v1541
        %v1672 = vpop.f32.mrb[0].mxu0
        %v1673 = vadd.f32 0.0, %v1672
        %v1674 = vpop.f32.mrb[0].mxu0
        %1675 = vmatprep.mubr.f32.mxu0 0.0
        %1676 = vmatmul.mubr.f32.gmra.mrb[0].mxu0 %v1544
        %v1677 = vpop.f32.mrb[0].mxu0
        %v1678 = vadd.f32 0.0, %v1677
        %v1679 = vpop.f32.mrb[0].mxu0
        %1680 = vmatprep.mubr.f32.mxu0 0.0
        %1681 = vmatmul.mubr.f32.gmra.mrb[0].mxu0 %v1547
        %v1682 = vpop.f32.mrb[0].mxu0
        %v1683 = vadd.f32 0.0, %v1682
        %v1684 = vpop.f32.mrb[0].mxu0
        %1685 = vmatprep.mubr.f32.mxu0 0.0
        %1686 = vmatmul.mubr.f32.gmra.mrb[0].mxu0 %v1550
        %v1687 = vpop.f32.mrb[0].mxu0
        %v1688 = vadd.f32 0.0, %v1687
        %v1689 = vpop.f32.mrb[0].mxu0
        %1690 = vmatprep.mubr.f32.mxu0 0.0
        %1691 = vmatmul.mubr.f32.gmra.mrb[0].mxu0 %v1553
        %v1692 = vpop.f32.mrb[0].mxu0
        %v1693 = vadd.f32 0.0, %v1692
        %v1694 = vpop.f32.mrb[0].mxu0
        %1695 = vmatprep.mubr.f32.mxu0 0.0
        %1696 = vmatmul.mubr.f32.gmra.mrb[0].mxu0 %v1556
        %v1697 = vpop.f32.mrb[0].mxu0
        %v1698 = vadd.f32 0.0, %v1697
        %v1699 = vpop.f32.mrb[0].mxu0
        %1700 = vmatprep.mubr.f32.mxu0 0.0
        %1701 = vmatmul.mubr.f32.gmra.mrb[0].mxu0 %v1559
        %v1702 = vpop.f32.mrb[0].mxu0
        %v1703 = vadd.f32 0.0, %v1702
        %v1704 = vpop.f32.mrb[0].mxu0
        %1705 = vdwg.mxu0
        %v1706 = vadd.f32 %v1476, %v1628
        %v1707 = vadd.f32 %v1477, %v1633
        %v1708 = vadd.f32 %v1478, %v1638
        %v1709 = vadd.f32 %v1479, %v1643
        %v1710 = vadd.f32 %v1480, %v1648
        %v1711 = vadd.f32 %v1481, %v1653
        %v1712 = vadd.f32 %v1482, %v1658
        %v1713 = vadd.f32 %v1483, %v1663
        %v1714 = vadd.f32 %v1484, %v1668
        %v1715 = vadd.f32 %v1485, %v1673
        %v1716 = vadd.f32 %v1486, %v1678
        %v1717 = vadd.f32 %v1487, %v1683
        %v1718 = vadd.f32 %v1488, %v1688
        %v1719 = vadd.f32 %v1489, %v1693
        %v1720 = vadd.f32 %v1490, %v1698
        %v1721 = vadd.f32 %v1491, %v1703
        %v1722 = vld [vmem:[%s1494 + $0x1] sm:$0xff]
        %v1723 = vld [vmem:[%s1494 + $0x9] sm:$0xff]
        %v1724 = vld [vmem:[%s1494 + $0x19] sm:$0xff]
        %v1725 = vld [vmem:[%s1494 + $0x21] sm:$0xff]
        %v1726 = vld [vmem:[%s1494 + $0x31] sm:$0xff]
        %v1727 = vld [vmem:[%s1494 + $0x39] sm:$0xff]
        %v1728 = vld [vmem:[%s1494 + $0x49] sm:$0xff]
        %v1729 = vld [vmem:[%s1494 + $0x51] sm:$0xff]
        %v1730 = vld [vmem:[%s1494 + $0x61] sm:$0xff]
        %v1731 = vld [vmem:[%s1494 + $0x69] sm:$0xff]
        %v1732 = vld [vmem:[%s1494 + $0x79] sm:$0xff]
        %v1733 = vld [vmem:[%s1494 + $0x81] sm:$0xff]
        %v1734 = vld [vmem:[%s1494 + $0x91] sm:$0xff]
        %v1735 = vld [vmem:[%s1494 + $0x99] sm:$0xff]
        %v1736 = vld [vmem:[%s1494 + $0xa9] sm:$0xff]
        %v1737 = vld [vmem:[%s1494 + $0xb1] sm:$0xff]
        %s1738 = scalar_lea.vmem %s1, 56
        %v1739 = vld [vmem:[%s1738] sm:$0xff]
        %v1741 = vsel %vm194, %v1722, 0
        %v1744 = vsel %vm194, %v1723, 0
        %v1747 = vsel %vm194, %v1724, 0
        %v1750 = vsel %vm194, %v1725, 0
        %v1753 = vsel %vm194, %v1726, 0
        %v1756 = vsel %vm194, %v1727, 0
        %v1759 = vsel %vm194, %v1728, 0
        %v1762 = vsel %vm194, %v1729, 0
        %v1765 = vsel %vm194, %v1730, 0
        %v1768 = vsel %vm194, %v1731, 0
        %v1771 = vsel %vm194, %v1732, 0
        %v1774 = vsel %vm194, %v1733, 0
        %v1777 = vsel %vm194, %v1734, 0
        %v1780 = vsel %vm194, %v1735, 0
        %v1783 = vsel %vm194, %v1736, 0
        %v1786 = vsel %vm194, %v1737, 0
        %1788 = vmatprep.subr.mxu0 0.0
        %1789 = vmatpush1.msra.mxu0 %v1739
        %1790 = vmatprep.subr.mxu0 0.0
        %1791 = vmatpush1.msra.mxu0 0.0
        %1792 = vmatprep.subr.mxu0 0.0
        %1793 = vmatpush1.msra.mxu0 0.0
        %1794 = vmatprep.subr.mxu0 0.0
        %1795 = vmatpush1.msra.mxu0 0.0
        %1796 = vmatprep.subr.mxu0 0.0
        %1797 = vmatpush1.msra.mxu0 0.0
        %1798 = vmatprep.subr.mxu0 0.0
        %1799 = vmatpush1.msra.mxu0 0.0
        %1800 = vmatprep.subr.mxu0 0.0
        %1801 = vmatpush1.msra.mxu0 0.0
        %1802 = vmatprep.subr.mxu0 0.0
        %1803 = vmatpush1.msra.mxu0 0.0
        %1804 = vmatprep.subr.mxu0 0.0
        %1805 = vmatpush1.msra.mxu0 0.0
        %1806 = vmatprep.subr.mxu0 0.0
        %1807 = vmatpush1.msra.mxu0 0.0
        %1808 = vmatprep.subr.mxu0 0.0
        %1809 = vmatpush1.msra.mxu0 0.0
        %1810 = vmatprep.subr.mxu0 0.0
        %1811 = vmatpush1.msra.mxu0 0.0
        %1812 = vmatprep.subr.mxu0 0.0
        %1813 = vmatpush1.msra.mxu0 0.0
        %1814 = vmatprep.subr.mxu0 0.0
        %1815 = vmatpush1.msra.mxu0 0.0
        %1816 = vmatprep.subr.mxu0 0.0
        %1817 = vmatpush1.msra.mxu0 0.0
        %1818 = vmatprep.subr.mxu0 0.0
        %1819 = vmatpush1.msra.mxu0 0.0
        %1820 = vmatprep.subr.mxu0 0.0
        %1821 = vmatpush1.msra.mxu0 0.0
        %1822 = vmatprep.subr.mxu0 0.0
        %1823 = vmatpush1.msra.mxu0 0.0
        %1824 = vmatprep.subr.mxu0 0.0
        %1825 = vmatpush1.msra.mxu0 0.0
        %1826 = vmatprep.subr.mxu0 0.0
        %1827 = vmatpush1.msra.mxu0 0.0
        %1828 = vmatprep.subr.mxu0 0.0
        %1829 = vmatpush1.msra.mxu0 0.0
        %1830 = vmatprep.subr.mxu0 0.0
        %1831 = vmatpush1.msra.mxu0 0.0
        %1832 = vmatprep.subr.mxu0 0.0
        %1833 = vmatpush1.msra.mxu0 0.0
        %1834 = vmatprep.subr.mxu0 0.0
        %1835 = vmatpush1.msra.mxu0 0.0
        %1836 = vmatprep.subr.mxu0 0.0
        %1837 = vmatpush1.msra.mxu0 0.0
        %1838 = vmatprep.subr.mxu0 0.0
        %1839 = vmatpush1.msra.mxu0 0.0
        %1840 = vmatprep.subr.mxu0 0.0
        %1841 = vmatpush1.msra.mxu0 0.0
        %1842 = vmatprep.subr.mxu0 0.0
        %1843 = vmatpush1.msra.mxu0 0.0
        %1844 = vmatprep.subr.mxu0 0.0
        %1845 = vmatpush1.msra.mxu0 0.0
        %1846 = vmatprep.subr.mxu0 0.0
        %1847 = vmatpush1.msra.mxu0 0.0
        %1848 = vmatprep.subr.mxu0 0.0
        %1849 = vmatpush1.msra.mxu0 0.0
        %1850 = vmatprep.subr.mxu0 0.0
        %1851 = vmatpush1.msra.mxu0 0.0
        %1852 = vmatprep.mubr.f32.mxu0 0.0
        %1853 = vmatmul.mubr.f32.gmra.mrb[0].mxu0 %v1741
        %v1854 = vpop.f32.mrb[0].mxu0
        %v1855 = vadd.f32 0.0, %v1854
        %v1856 = vpop.f32.mrb[0].mxu0
        %1857 = vmatprep.mubr.f32.mxu0 0.0
        %1858 = vmatmul.mubr.f32.gmra.mrb[0].mxu0 %v1744
        %v1859 = vpop.f32.mrb[0].mxu0
        %v1860 = vadd.f32 0.0, %v1859
        %v1861 = vpop.f32.mrb[0].mxu0
        %1862 = vmatprep.mubr.f32.mxu0 0.0
        %1863 = vmatmul.mubr.f32.gmra.mrb[0].mxu0 %v1747
        %v1864 = vpop.f32.mrb[0].mxu0
        %v1865 = vadd.f32 0.0, %v1864
        %v1866 = vpop.f32.mrb[0].mxu0
        %1867 = vmatprep.mubr.f32.mxu0 0.0
        %1868 = vmatmul.mubr.f32.gmra.mrb[0].mxu0 %v1750
        %v1869 = vpop.f32.mrb[0].mxu0
        %v1870 = vadd.f32 0.0, %v1869
        %v1871 = vpop.f32.mrb[0].mxu0
        %1872 = vmatprep.mubr.f32.mxu0 0.0
        %1873 = vmatmul.mubr.f32.gmra.mrb[0].mxu0 %v1753
        %v1874 = vpop.f32.mrb[0].mxu0
        %v1875 = vadd.f32 0.0, %v1874
        %v1876 = vpop.f32.mrb[0].mxu0
        %1877 = vmatprep.mubr.f32.mxu0 0.0
        %1878 = vmatmul.mubr.f32.gmra.mrb[0].mxu0 %v1756
        %v1879 = vpop.f32.mrb[0].mxu0
        %v1880 = vadd.f32 0.0, %v1879
        %v1881 = vpop.f32.mrb[0].mxu0
        %1882 = vmatprep.mubr.f32.mxu0 0.0
        %1883 = vmatmul.mubr.f32.gmra.mrb[0].mxu0 %v1759
        %v1884 = vpop.f32.mrb[0].mxu0
        %v1885 = vadd.f32 0.0, %v1884
        %v1886 = vpop.f32.mrb[0].mxu0
        %1887 = vmatprep.mubr.f32.mxu0 0.0
        %1888 = vmatmul.mubr.f32.gmra.mrb[0].mxu0 %v1762
        %v1889 = vpop.f32.mrb[0].mxu0
        %v1890 = vadd.f32 0.0, %v1889
        %v1891 = vpop.f32.mrb[0].mxu0
        %1892 = vmatprep.mubr.f32.mxu0 0.0
        %1893 = vmatmul.mubr.f32.gmra.mrb[0].mxu0 %v1765
        %v1894 = vpop.f32.mrb[0].mxu0
        %v1895 = vadd.f32 0.0, %v1894
        %v1896 = vpop.f32.mrb[0].mxu0
        %1897 = vmatprep.mubr.f32.mxu0 0.0
        %1898 = vmatmul.mubr.f32.gmra.mrb[0].mxu0 %v1768
        %v1899 = vpop.f32.mrb[0].mxu0
        %v1900 = vadd.f32 0.0, %v1899
        %v1901 = vpop.f32.mrb[0].mxu0
        %1902 = vmatprep.mubr.f32.mxu0 0.0
        %1903 = vmatmul.mubr.f32.gmra.mrb[0].mxu0 %v1771
        %v1904 = vpop.f32.mrb[0].mxu0
        %v1905 = vadd.f32 0.0, %v1904
        %v1906 = vpop.f32.mrb[0].mxu0
        %1907 = vmatprep.mubr.f32.mxu0 0.0
        %1908 = vmatmul.mubr.f32.gmra.mrb[0].mxu0 %v1774
        %v1909 = vpop.f32.mrb[0].mxu0
        %v1910 = vadd.f32 0.0, %v1909
        %v1911 = vpop.f32.mrb[0].mxu0
        %1912 = vmatprep.mubr.f32.mxu0 0.0
        %1913 = vmatmul.mubr.f32.gmra.mrb[0].mxu0 %v1777
        %v1914 = vpop.f32.mrb[0].mxu0
        %v1915 = vadd.f32 0.0, %v1914
        %v1916 = vpop.f32.mrb[0].mxu0
        %1917 = vmatprep.mubr.f32.mxu0 0.0
        %1918 = vmatmul.mubr.f32.gmra.mrb[0].mxu0 %v1780
        %v1919 = vpop.f32.mrb[0].mxu0
        %v1920 = vadd.f32 0.0, %v1919
        %v1921 = vpop.f32.mrb[0].mxu0
        %1922 = vmatprep.mubr.f32.mxu0 0.0
        %1923 = vmatmul.mubr.f32.gmra.mrb[0].mxu0 %v1783
        %v1924 = vpop.f32.mrb[0].mxu0
        %v1925 = vadd.f32 0.0, %v1924
        %v1926 = vpop.f32.mrb[0].mxu0
        %1927 = vmatprep.mubr.f32.mxu0 0.0
        %1928 = vmatmul.mubr.f32.gmra.mrb[0].mxu0 %v1786
        %v1929 = vpop.f32.mrb[0].mxu0
        %v1930 = vadd.f32 0.0, %v1929
        %v1931 = vpop.f32.mrb[0].mxu0
        %1932 = vdwg.mxu0
        %v1933 = vadd.f32 %v1706, %v1855
        %v1934 = vadd.f32 %v1707, %v1860
        %v1935 = vadd.f32 %v1708, %v1865
        %v1936 = vadd.f32 %v1709, %v1870
        %v1937 = vadd.f32 %v1710, %v1875
        %v1938 = vadd.f32 %v1711, %v1880
        %v1939 = vadd.f32 %v1712, %v1885
        %v1940 = vadd.f32 %v1713, %v1890
        %v1941 = vadd.f32 %v1714, %v1895
        %v1942 = vadd.f32 %v1715, %v1900
        %v1943 = vadd.f32 %v1716, %v1905
        %v1944 = vadd.f32 %v1717, %v1910
        %v1945 = vadd.f32 %v1718, %v1915
        %v1946 = vadd.f32 %v1719, %v1920
        %v1947 = vadd.f32 %v1720, %v1925
        %v1948 = vadd.f32 %v1721, %v1930
        %v1949 = vld [vmem:[%s1494 + $0x2] sm:$0xff]
        %v1950 = vld [vmem:[%s1494 + $0xa] sm:$0xff]
        %v1951 = vld [vmem:[%s1494 + $0x1a] sm:$0xff]
        %v1952 = vld [vmem:[%s1494 + $0x22] sm:$0xff]
        %v1953 = vld [vmem:[%s1494 + $0x32] sm:$0xff]
        %v1954 = vld [vmem:[%s1494 + $0x3a] sm:$0xff]
        %v1955 = vld [vmem:[%s1494 + $0x4a] sm:$0xff]
        %v1956 = vld [vmem:[%s1494 + $0x52] sm:$0xff]
        %v1957 = vld [vmem:[%s1494 + $0x62] sm:$0xff]
        %v1958 = vld [vmem:[%s1494 + $0x6a] sm:$0xff]
        %v1959 = vld [vmem:[%s1494 + $0x7a] sm:$0xff]
        %v1960 = vld [vmem:[%s1494 + $0x82] sm:$0xff]
        %v1961 = vld [vmem:[%s1494 + $0x92] sm:$0xff]
        %v1962 = vld [vmem:[%s1494 + $0x9a] sm:$0xff]
        %v1963 = vld [vmem:[%s1494 + $0xaa] sm:$0xff]
        %v1964 = vld [vmem:[%s1494 + $0xb2] sm:$0xff]
        %s1965 = scalar_lea.vmem %s1, 64
        %v1966 = vld [vmem:[%s1965] sm:$0xff]
        %v1968 = vsel %vm194, %v1949, 0
        %v1971 = vsel %vm194, %v1950, 0
        %v1974 = vsel %vm194, %v1951, 0
        %v1977 = vsel %vm194, %v1952, 0
        %v1980 = vsel %vm194, %v1953, 0
        %v1983 = vsel %vm194, %v1954, 0
        %v1986 = vsel %vm194, %v1955, 0
        %v1989 = vsel %vm194, %v1956, 0
        %v1992 = vsel %vm194, %v1957, 0
        %v1995 = vsel %vm194, %v1958, 0
        %v1998 = vsel %vm194, %v1959, 0
        %v2001 = vsel %vm194, %v1960, 0
        %v2004 = vsel %vm194, %v1961, 0
        %v2007 = vsel %vm194, %v1962, 0
        %v2010 = vsel %vm194, %v1963, 0
        %v2013 = vsel %vm194, %v1964, 0
        %2015 = vmatprep.subr.mxu0 0.0
        %2016 = vmatpush1.msra.mxu0 %v1966
        %2017 = vmatprep.subr.mxu0 0.0
        %2018 = vmatpush1.msra.mxu0 0.0
        %2019 = vmatprep.subr.mxu0 0.0
        %2020 = vmatpush1.msra.mxu0 0.0
        %2021 = vmatprep.subr.mxu0 0.0
        %2022 = vmatpush1.msra.mxu0 0.0
        %2023 = vmatprep.subr.mxu0 0.0
        %2024 = vmatpush1.msra.mxu0 0.0
        %2025 = vmatprep.subr.mxu0 0.0
        %2026 = vmatpush1.msra.mxu0 0.0
        %2027 = vmatprep.subr.mxu0 0.0
        %2028 = vmatpush1.msra.mxu0 0.0
        %2029 = vmatprep.subr.mxu0 0.0
        %2030 = vmatpush1.msra.mxu0 0.0
        %2031 = vmatprep.subr.mxu0 0.0
        %2032 = vmatpush1.msra.mxu0 0.0
        %2033 = vmatprep.subr.mxu0 0.0
        %2034 = vmatpush1.msra.mxu0 0.0
        %2035 = vmatprep.subr.mxu0 0.0
        %2036 = vmatpush1.msra.mxu0 0.0
        %2037 = vmatprep.subr.mxu0 0.0
        %2038 = vmatpush1.msra.mxu0 0.0
        %2039 = vmatprep.subr.mxu0 0.0
        %2040 = vmatpush1.msra.mxu0 0.0
        %2041 = vmatprep.subr.mxu0 0.0
        %2042 = vmatpush1.msra.mxu0 0.0
        %2043 = vmatprep.subr.mxu0 0.0
        %2044 = vmatpush1.msra.mxu0 0.0
        %2045 = vmatprep.subr.mxu0 0.0
        %2046 = vmatpush1.msra.mxu0 0.0
        %2047 = vmatprep.subr.mxu0 0.0
        %2048 = vmatpush1.msra.mxu0 0.0
        %2049 = vmatprep.subr.mxu0 0.0
        %2050 = vmatpush1.msra.mxu0 0.0
        %2051 = vmatprep.subr.mxu0 0.0
        %2052 = vmatpush1.msra.mxu0 0.0
        %2053 = vmatprep.subr.mxu0 0.0
        %2054 = vmatpush1.msra.mxu0 0.0
        %2055 = vmatprep.subr.mxu0 0.0
        %2056 = vmatpush1.msra.mxu0 0.0
        %2057 = vmatprep.subr.mxu0 0.0
        %2058 = vmatpush1.msra.mxu0 0.0
        %2059 = vmatprep.subr.mxu0 0.0
        %2060 = vmatpush1.msra.mxu0 0.0
        %2061 = vmatprep.subr.mxu0 0.0
        %2062 = vmatpush1.msra.mxu0 0.0
        %2063 = vmatprep.subr.mxu0 0.0
        %2064 = vmatpush1.msra.mxu0 0.0
        %2065 = vmatprep.subr.mxu0 0.0
        %2066 = vmatpush1.msra.mxu0 0.0
        %2067 = vmatprep.subr.mxu0 0.0
        %2068 = vmatpush1.msra.mxu0 0.0
        %2069 = vmatprep.subr.mxu0 0.0
        %2070 = vmatpush1.msra.mxu0 0.0
        %2071 = vmatprep.subr.mxu0 0.0
        %2072 = vmatpush1.msra.mxu0 0.0
        %2073 = vmatprep.subr.mxu0 0.0
        %2074 = vmatpush1.msra.mxu0 0.0
        %2075 = vmatprep.subr.mxu0 0.0
        %2076 = vmatpush1.msra.mxu0 0.0
        %2077 = vmatprep.subr.mxu0 0.0
        %2078 = vmatpush1.msra.mxu0 0.0
        %2079 = vmatprep.mubr.f32.mxu0 0.0
        %2080 = vmatmul.mubr.f32.gmra.mrb[0].mxu0 %v1968
        %v2081 = vpop.f32.mrb[0].mxu0
        %v2082 = vadd.f32 0.0, %v2081
        %v2083 = vpop.f32.mrb[0].mxu0
        %2084 = vmatprep.mubr.f32.mxu0 0.0
        %2085 = vmatmul.mubr.f32.gmra.mrb[0].mxu0 %v1971
        %v2086 = vpop.f32.mrb[0].mxu0
        %v2087 = vadd.f32 0.0, %v2086
        %v2088 = vpop.f32.mrb[0].mxu0
        %2089 = vmatprep.mubr.f32.mxu0 0.0
        %2090 = vmatmul.mubr.f32.gmra.mrb[0].mxu0 %v1974
        %v2091 = vpop.f32.mrb[0].mxu0
        %v2092 = vadd.f32 0.0, %v2091
        %v2093 = vpop.f32.mrb[0].mxu0
        %2094 = vmatprep.mubr.f32.mxu0 0.0
        %2095 = vmatmul.mubr.f32.gmra.mrb[0].mxu0 %v1977
        %v2096 = vpop.f32.mrb[0].mxu0
        %v2097 = vadd.f32 0.0, %v2096
        %v2098 = vpop.f32.mrb[0].mxu0
        %2099 = vmatprep.mubr.f32.mxu0 0.0
        %2100 = vmatmul.mubr.f32.gmra.mrb[0].mxu0 %v1980
        %v2101 = vpop.f32.mrb[0].mxu0
        %v2102 = vadd.f32 0.0, %v2101
        %v2103 = vpop.f32.mrb[0].mxu0
        %2104 = vmatprep.mubr.f32.mxu0 0.0
        %2105 = vmatmul.mubr.f32.gmra.mrb[0].mxu0 %v1983
        %v2106 = vpop.f32.mrb[0].mxu0
        %v2107 = vadd.f32 0.0, %v2106
        %v2108 = vpop.f32.mrb[0].mxu0
        %2109 = vmatprep.mubr.f32.mxu0 0.0
        %2110 = vmatmul.mubr.f32.gmra.mrb[0].mxu0 %v1986
        %v2111 = vpop.f32.mrb[0].mxu0
        %v2112 = vadd.f32 0.0, %v2111
        %v2113 = vpop.f32.mrb[0].mxu0
        %2114 = vmatprep.mubr.f32.mxu0 0.0
        %2115 = vmatmul.mubr.f32.gmra.mrb[0].mxu0 %v1989
        %v2116 = vpop.f32.mrb[0].mxu0
        %v2117 = vadd.f32 0.0, %v2116
        %v2118 = vpop.f32.mrb[0].mxu0
        %2119 = vmatprep.mubr.f32.mxu0 0.0
        %2120 = vmatmul.mubr.f32.gmra.mrb[0].mxu0 %v1992
        %v2121 = vpop.f32.mrb[0].mxu0
        %v2122 = vadd.f32 0.0, %v2121
        %v2123 = vpop.f32.mrb[0].mxu0
        %2124 = vmatprep.mubr.f32.mxu0 0.0
        %2125 = vmatmul.mubr.f32.gmra.mrb[0].mxu0 %v1995
        %v2126 = vpop.f32.mrb[0].mxu0
        %v2127 = vadd.f32 0.0, %v2126
        %v2128 = vpop.f32.mrb[0].mxu0
        %2129 = vmatprep.mubr.f32.mxu0 0.0
        %2130 = vmatmul.mubr.f32.gmra.mrb[0].mxu0 %v1998
        %v2131 = vpop.f32.mrb[0].mxu0
        %v2132 = vadd.f32 0.0, %v2131
        %v2133 = vpop.f32.mrb[0].mxu0
        %2134 = vmatprep.mubr.f32.mxu0 0.0
        %2135 = vmatmul.mubr.f32.gmra.mrb[0].mxu0 %v2001
        %v2136 = vpop.f32.mrb[0].mxu0
        %v2137 = vadd.f32 0.0, %v2136
        %v2138 = vpop.f32.mrb[0].mxu0
        %2139 = vmatprep.mubr.f32.mxu0 0.0
        %2140 = vmatmul.mubr.f32.gmra.mrb[0].mxu0 %v2004
        %v2141 = vpop.f32.mrb[0].mxu0
        %v2142 = vadd.f32 0.0, %v2141
        %v2143 = vpop.f32.mrb[0].mxu0
        %2144 = vmatprep.mubr.f32.mxu0 0.0
        %2145 = vmatmul.mubr.f32.gmra.mrb[0].mxu0 %v2007
        %v2146 = vpop.f32.mrb[0].mxu0
        %v2147 = vadd.f32 0.0, %v2146
        %v2148 = vpop.f32.mrb[0].mxu0
        %2149 = vmatprep.mubr.f32.mxu0 0.0
        %2150 = vmatmul.mubr.f32.gmra.mrb[0].mxu0 %v2010
        %v2151 = vpop.f32.mrb[0].mxu0
        %v2152 = vadd.f32 0.0, %v2151
        %v2153 = vpop.f32.mrb[0].mxu0
        %2154 = vmatprep.mubr.f32.mxu0 0.0
        %2155 = vmatmul.mubr.f32.gmra.mrb[0].mxu0 %v2013
        %v2156 = vpop.f32.mrb[0].mxu0
        %v2157 = vadd.f32 0.0, %v2156
        %v2158 = vpop.f32.mrb[0].mxu0
        %2159 = vdwg.mxu0
        %v2160 = vadd.f32 %v1933, %v2082
        %v2161 = vadd.f32 %v1934, %v2087
        %v2162 = vadd.f32 %v1935, %v2092
        %v2163 = vadd.f32 %v1936, %v2097
        %v2164 = vadd.f32 %v1937, %v2102
        %v2165 = vadd.f32 %v1938, %v2107
        %v2166 = vadd.f32 %v1939, %v2112
        %v2167 = vadd.f32 %v1940, %v2117
        %v2168 = vadd.f32 %v1941, %v2122
        %v2169 = vadd.f32 %v1942, %v2127
        %v2170 = vadd.f32 %v1943, %v2132
        %v2171 = vadd.f32 %v1944, %v2137
        %v2172 = vadd.f32 %v1945, %v2142
        %v2173 = vadd.f32 %v1946, %v2147
        %v2174 = vadd.f32 %v1947, %v2152
        %v2175 = vadd.f32 %v1948, %v2157
        %v2176 = vadd.f32 %v2160, %v2161
        %v2177 = vadd.f32 %v2176, %v2162
        %v2178 = vadd.f32 %v2177, %v2163
        %v2179 = vadd.f32 %v2178, %v2164
        %v2180 = vadd.f32 %v2179, %v2165
        %v2181 = vadd.f32 %v2180, %v2166
        %v2182 = vadd.f32 %v2181, %v2167
        %v2183 = vadd.f32 %v2182, %v2168
        %v2184 = vadd.f32 %v2183, %v2169
        %v2185 = vadd.f32 %v2184, %v2170
        %v2186 = vadd.f32 %v2185, %v2171
        %v2187 = vadd.f32 %v2186, %v2172
        %v2188 = vadd.f32 %v2187, %v2173
        %v2189 = vadd.f32 %v2188, %v2174
        %v2190 = vadd.f32 %v2189, %v2175
        %v2191 = vrot.slane %v2190, 4
        %v2192 = vadd.f32 %v2190, %v2191
        %v2193 = vrot.slane %v2192, 2
        %v2194 = vadd.f32 %v2192, %v2193
        %v2195 = vrot.slane %v2194, 1
        %v2196 = vadd.f32 %v2194, %v2195
        %v2197 = vmul.f32 %v2160, %v2160
        %v2198 = vmul.f32 %v2161, %v2161
        %v2199 = vmul.f32 %v2162, %v2162
        %v2200 = vmul.f32 %v2163, %v2163
        %v2201 = vmul.f32 %v2164, %v2164
        %v2202 = vmul.f32 %v2165, %v2165
        %v2203 = vmul.f32 %v2166, %v2166
        %v2204 = vmul.f32 %v2167, %v2167
        %v2205 = vmul.f32 %v2168, %v2168
        %v2206 = vmul.f32 %v2169, %v2169
        %v2207 = vmul.f32 %v2170, %v2170
        %v2208 = vmul.f32 %v2171, %v2171
        %v2209 = vmul.f32 %v2172, %v2172
        %v2210 = vmul.f32 %v2173, %v2173
        %v2211 = vmul.f32 %v2174, %v2174
        %v2212 = vmul.f32 %v2175, %v2175
        %v2213 = vadd.f32 %v2197, %v2198
        %v2214 = vadd.f32 %v2213, %v2199
        %v2215 = vadd.f32 %v2214, %v2200
        %v2216 = vadd.f32 %v2215, %v2201
        %v2217 = vadd.f32 %v2216, %v2202
        %v2218 = vadd.f32 %v2217, %v2203
        %v2219 = vadd.f32 %v2218, %v2204
        %v2220 = vadd.f32 %v2219, %v2205
        %v2221 = vadd.f32 %v2220, %v2206
        %v2222 = vadd.f32 %v2221, %v2207
        %v2223 = vadd.f32 %v2222, %v2208
        %v2224 = vadd.f32 %v2223, %v2209
        %v2225 = vadd.f32 %v2224, %v2210
        %v2226 = vadd.f32 %v2225, %v2211
        %v2227 = vadd.f32 %v2226, %v2212
        %v2228 = vrot.slane %v2227, 4
        %v2229 = vadd.f32 %v2227, %v2228
        %v2230 = vrot.slane %v2229, 2
        %v2231 = vadd.f32 %v2229, %v2230
        %v2232 = vrot.slane %v2231, 1
        %v2233 = vadd.f32 %v2231, %v2232
        %vm2234 = vcmask 1040384
        %v2235 = vsel %vm2234, %v2196, %v2233
        %2236 = vst [vmem:[%s150] sm:$0x3] %v2235
        %s2237 = sand.u32 %s85, 1
        %s2238 = scalar_lea.sflag [#allocation3], %s2237
        %s2239 = sand.u32 %s85, 1
        %s2240 = smul.addr %s2239, 2
        %s2241 = scalar_lea.vmem [#allocation2], %s2240
        // Predicated region
        $region29: #{tpu_custom_call.1} parent=27 // pred_check
          %p2242 = pneg %p95
        $region30: #{tpu_custom_call.1} parent=27 // pred_check_branch
          %2244 = sbr.rel (%p2242) target = $region32
        $region31: #{tpu_custom_call.1} parent=27 // pred_region
          %s2246 = ssub.s32 32, 32
          %2247 = vsyncadd %s2238, %s2246
          %s2248 = smul.addr %s20, 2
          %s2249 = sadd.s32 %s21, %s2248
          %s2250 = smul.addr %s2249, 32
          %s2251 = scalar_lea.hbm %s2, %s2250
          %s2253 = sshll.u32 %s2241, 4
          %s2254 = int_to_ptr.vmem [resolvable:$true] %s2253
          %2256 = dma.vmem_to_hbm [thread:$0]  %s2254, 32, %s2251, %s2238
        $region32: #{tpu_custom_call.1} parent=27 // pred_fallthru
          _
      $region28: #{tpu_custom_call.1} parent=5 // pred_fallthru
        _
      %p2257 = scmp.le.s32.totalorder 2, %s11
      // Predicated region
      $region33: #{tpu_custom_call.1} parent=5 // pred_check
        %p2258 = pneg %p2257
      $region34: #{tpu_custom_call.1} parent=5 // pred_check_branch
        %2260 = sbr.rel (%p2258) target = $region36
      $region35: #{tpu_custom_call.1} parent=5 // pred_region
        %s2261 = ssub.s32 %s11, 2
        // Predicated region
        $region37: #{tpu_custom_call.1} parent=35 // pred_check
          %p2262 = pneg %p101
        $region38: #{tpu_custom_call.1} parent=35 // pred_check_branch
          %2264 = sbr.rel (%p2262) target = $region40
        $region39: #{tpu_custom_call.1} parent=35 // pred_region
          %s2265 = sand.u32 %s86, 1
          %s2266 = scalar_lea.sflag [#allocation3], %s2265
          %s2267 = sand.u32 %s86, 1
          %s2268 = smul.addr %s2267, 2
          %s2269 = scalar_lea.vmem [#allocation2], %s2268
          %2270 = dma.done %s2266, 32
        $region40: #{tpu_custom_call.1} parent=35 // pred_fallthru
          _
      $region36: #{tpu_custom_call.1} parent=5 // pred_fallthru
        _
    $region6: #{tpu_custom_call.1} parent=1 // loop_footer
      %s15 = sadd.s32 1, %s11
    $region7: #{tpu_custom_call.1} parent=1 // loop_footer_branch
      %10 = sbr.rel target = $region3
    $region8: #{tpu_custom_call.1} parent=1 // loop_exit
      _
    %2271 = vsyncpa [#allocation3], 1
    %s2272 = scalar_lea.sflag [#allocation3], 1
    %2273 = vsyncpa %s2272, 1

</llo_original>
